<compile_context>
chip_gen: v6e
topology: v6e:2x2x1
jax: 0.10.0
libtpu: 0.0.40
codegen_flags: <defaults>
</compile_context>

<pallas_src>
import functools
import math

import jax
import jax.numpy as jnp
from jax.experimental import pallas as pl
from jax.experimental.pallas import tpu as pltpu


def encoder_layer_kernel(x_ref, wqkv_ref, bqkv_ref, wo_ref, w1_ref, b1_ref,
                         w2_ref, vec_ref, o_ref, act_ref, *, num_heads, eps):
    layer = pl.program_id(1)
    n_layers = pl.num_programs(1)

    # Layer 0: seed the VMEM-resident f32 activation carry from the input block.
    @pl.when(layer == 0)
    def _():
        act_ref[...] = x_ref[...].astype(jnp.float32)

    Bt, S, D = act_ref.shape
    H = num_heads
    hd = D // H
    N = Bt * S
    scale = 1.0 / math.sqrt(hd)

    x = act_ref[...].reshape(N, D)                    # (N, D) f32 residual path
    x_bf = x.astype(jnp.bfloat16)

    # Packed per-layer vectors: rows = [b_o, gamma1, beta1, b2, gamma2, beta2, 0, 0]
    vecs = vec_ref[0]                                  # (8, D) f32
    b_o, g1, be1 = vecs[0:1, :], vecs[1:2, :], vecs[2:3, :]
    b2f, g2, be2 = vecs[3:4, :], vecs[4:5, :], vecs[5:6, :]

    # ---------------- multi-head self-attention ----------------
    # Single MXU matmul for Q, K and V of all heads.
    qkv = jnp.dot(x_bf, wqkv_ref[0], preferred_element_type=jnp.float32)
    qkv = (qkv + bqkv_ref[0]).astype(jnp.bfloat16)     # (N, 3D) bf16
    qkv = qkv.reshape(Bt, S, 3 * D)

    # Weight columns are host-grouped per head: head h owns columns
    # [3*hd*h, 3*hd*(h+1)) = [q_h | k_h | v_h].  -> one lane slice per head, one
    # stack, then three static lane slices give head-batched q/k/v tensors.
    g = jnp.stack([qkv[:, :, 3 * hd * h: 3 * hd * (h + 1)] for h in range(H)],
                  axis=0).reshape(H * Bt, S, 3 * hd)
    qb = g[..., 0 * hd:1 * hd]                          # (H*Bt, S, hd) bf16
    kb = g[..., 1 * hd:2 * hd]
    vb = g[..., 2 * hd:3 * hd]

    # Batched attention: one contraction for all heads / batch elements.
    scores = jnp.einsum('gqd,gkd->gqk', qb, kb,
                        preferred_element_type=jnp.float32) * scale
    scores = scores - jnp.max(scores, axis=-1, keepdims=True)
    p = jnp.exp(scores)
    # approx reciprocal runs on the EUP (off the VPU critical path); ~1e-3 rel err.
    p = p * pl.reciprocal(jnp.sum(p, axis=-1, keepdims=True), approx=True)
    ctx = jnp.einsum('gqk,gkd->gqd', p.astype(jnp.bfloat16), vb,
                     preferred_element_type=jnp.float32)   # (H*Bt, S, hd)

    # Merge heads: single lane concat (head-major columns == W_o row order).
    ctx = ctx.reshape(H, N, hd)
    attn = jnp.concatenate([ctx[h] for h in range(H)], axis=-1)   # (N, D)
    attn = jnp.dot(attn.astype(jnp.bfloat16), wo_ref[0],
                   preferred_element_type=jnp.float32) + b_o

    def layer_norm(v, gamma, beta):
        mean = jnp.mean(v, axis=-1, keepdims=True)
        c = v - mean                                   # two-pass variance
        var = jnp.mean(c * c, axis=-1, keepdims=True)
        return c * jax.lax.rsqrt(var + eps) * gamma + beta

    # TODO(synk): dropout layers are identity (inference / eval mode).
    h1 = layer_norm(attn + x, g1, be1)

    # ---------------- feed-forward network ----------------
    # TODO(synk): for v7x-sized D/Hf (e.g. 1024/4096) chunk w1/w2 over Hf with a
    # nested pltpu.emit_pipeline to stay inside the 64 MiB per-TC VMEM budget.
    ff = jnp.dot(h1.astype(jnp.bfloat16), w1_ref[0],
                 preferred_element_type=jnp.float32) + b1_ref[0]
    ff = jnp.maximum(ff, 0.0)                           # ReLU
    ff = jnp.dot(ff.astype(jnp.bfloat16), w2_ref[0],
                 preferred_element_type=jnp.float32) + b2f

    out = layer_norm(ff + h1, g2, be2).reshape(Bt, S, D)

    @pl.when(layer < n_layers - 1)
    def _():
        act_ref[...] = out                              # carry in VMEM scratch

    @pl.when(layer == n_layers - 1)
    def _():
        o_ref[...] = out.astype(o_ref.dtype)            # single HBM writeback


def _pick_batch_tile(B, S, target_rows=512, min_batch_blocks=1):
    """Largest divisor Bt of B with Bt*S <= target_rows (big tiles cut the
    (B/Bt)-proportional per-layer weight re-streaming and deepen MXU passes),
    while keeping >= min_batch_blocks steps on the parallel batch axis
    (pass 2 on v7x so both TensorCores get work)."""
    best = 1
    for bt in range(1, B + 1):
        if B % bt == 0 and bt * S <= target_rows and B // bt >= min_batch_blocks:
            best = bt
    return best


def _vmem_limit_bytes(Bt, S, D, Hf, H):
    """Explicit scoped-VMEM budget: double-buffered weight/bias slabs + activation
    blocks + f32 temporaries, with headroom (defaults are only 16/32 MiB)."""
    N = Bt * S
    w_stream = 2 * 2 * (3 * D * D + D * D + 2 * D * Hf)     # bf16 weights, 2x buffered
    v_stream = 2 * 4 * (3 * D + Hf + 8 * D)                 # f32 bias/LN slabs
    act = 4 * Bt * S * D * (2 + 2 + 1)                      # x(2buf) + out(2buf) + scratch
    tmp = 4 * (3 * N * D + 2 * H * Bt * S * S + N * Hf + 4 * N * D)
    est = int(1.5 * (w_stream + v_stream + act + tmp))
    return min(max(est, 32 * 1024 * 1024), 100 * 1024 * 1024)


def encoder_forward(x, params, num_heads, *, batch_tile=None, eps=1e-5,
                    min_batch_blocks=1):
    B, S, D = x.shape
    L = params["w_qkv"].shape[0]
    Hf = params["w1"].shape[2]
    assert D % num_heads == 0, "d_model must be divisible by num_heads"
    # TODO(synk): for best lane density pad S (with attention masking) to a
    # multiple of 128 on the host before calling.
    Bt = batch_tile if batch_tile is not None else _pick_batch_tile(
        B, S, min_batch_blocks=min_batch_blocks)
    assert B % Bt == 0

    def act_spec():
        # Constant over the layer axis -> activation block stays resident in VMEM.
        return pl.BlockSpec((Bt, S, D), lambda b, l: (b, 0, 0))

    def layer_spec(shape):
        # Per-layer weight slab; default double-buffering prefetches layer l+1
        # weights while layer l computes.
        return pl.BlockSpec((1,) + shape,
                            lambda b, l, _n=len(shape): (l,) + (0,) * _n)

    kern = functools.partial(encoder_layer_kernel, num_heads=num_heads, eps=eps)
    return pl.pallas_call(
        kern,
        out_shape=jax.ShapeDtypeStruct((B, S, D), jnp.float32),
        grid_spec=pltpu.PrefetchScalarGridSpec(
            num_scalar_prefetch=0,
            grid=(B // Bt, L),
            in_specs=[
                act_spec(),
                layer_spec((D, 3 * D)),     # w_qkv (head-grouped columns, bf16)
                layer_spec((1, 3 * D)),     # b_qkv (same column order, f32)
                layer_spec((D, D)),         # w_o
                layer_spec((D, Hf)),        # w1
                layer_spec((1, Hf)),        # b1
                layer_spec((Hf, D)),        # w2
                layer_spec((8, D)),         # packed [b_o, g1, be1, b2, g2, be2, 0, 0]
            ],
            out_specs=act_spec(),
            scratch_shapes=[pltpu.VMEM((Bt, S, D), jnp.float32)],
        ),
        compiler_params=pltpu.CompilerParams(
            dimension_semantics=("parallel", "arbitrary"),
            vmem_limit_bytes=_vmem_limit_bytes(Bt, S, D, Hf, num_heads)),
    )(x, params["w_qkv"], params["b_qkv"], params["w_o"],
      params["w1"], params["b1"], params["w2"], params["vecs"])


def _group_qkv_by_head(w_q, w_k, w_v, num_heads):
    """Reorder packed-QKV columns so head h owns the contiguous column block
    [3*hd*h, 3*hd*(h+1)) = [Wq_h | Wk_h | Wv_h].  One lane slice per head inside
    the kernel then yields that head's full q/k/v projection.
    (To load real PyTorch weights: in_proj_weight is (3D, D); split into Wq/Wk/Wv,
     transpose each to (D, D), then pass them here.)"""
    hd = w_q.shape[-1] // num_heads
    cols = []
    for h in range(num_heads):
        sl = slice(h * hd, (h + 1) * hd)
        cols += [w_q[..., sl], w_k[..., sl], w_v[..., sl]]
    return jnp.concatenate(cols, axis=-1)


def init_encoder_params(key, num_layers, d_model, ffn_hidden, num_heads):
    """Per-layer weights stacked along a leading layer axis.  Matmul weights in
    bf16 (MXU-native, half the HBM traffic); biases / LN params in f32.  The
    small D-wide vectors are packed into one (L, 8, D) slab."""
    ks = jax.random.split(key, 12)
    L, D, Hf = num_layers, d_model, ffn_hidden

    def lin(k, shape, fan_in, dtype):
        bound = 1.0 / math.sqrt(fan_in)   # PyTorch nn.Linear default init range
        return jax.random.uniform(k, shape, jnp.float32, -bound, bound).astype(dtype)

    w_q = lin(ks[0], (L, D, D), D, jnp.float32)
    w_k = lin(ks[1], (L, D, D), D, jnp.float32)
    w_v = lin(ks[2], (L, D, D), D, jnp.float32)
    b_q = lin(ks[3], (L, 1, D), D, jnp.float32)
    b_k = lin(ks[4], (L, 1, D), D, jnp.float32)
    b_v = lin(ks[5], (L, 1, D), D, jnp.float32)
    w_o = lin(ks[6], (L, D, D), D, jnp.bfloat16)
    b_o = lin(ks[7], (L, D), D, jnp.float32)
    w1 = lin(ks[8], (L, D, Hf), D, jnp.bfloat16)
    b1 = lin(ks[9], (L, 1, Hf), D, jnp.float32)
    w2 = lin(ks[10], (L, Hf, D), Hf, jnp.bfloat16)
    b2 = lin(ks[11], (L, D), Hf, jnp.float32)
    gamma1 = jnp.ones((L, D), jnp.float32)
    beta1 = jnp.zeros((L, D), jnp.float32)
    gamma2 = jnp.ones((L, D), jnp.float32)
    beta2 = jnp.zeros((L, D), jnp.float32)

    zeros = jnp.zeros((L, D), jnp.float32)
    vecs = jnp.stack([b_o, gamma1, beta1, b2, gamma2, beta2, zeros, zeros], axis=1)

    return dict(
        w_qkv=_group_qkv_by_head(w_q, w_k, w_v, num_heads).astype(jnp.bfloat16),
        b_qkv=_group_qkv_by_head(b_q, b_k, b_v, num_heads),
        w_o=w_o, w1=w1, b1=b1, w2=w2, vecs=vecs,
    )


if __name__ == "__main__":
    # Small, forward-consistent shapes
    batch, seq_len = 2, 8
    d_model, ffn_hidden, num_heads, num_layers = 32, 64, 4, 2

    root = jax.random.PRNGKey(0)
    x_key, p_key = jax.random.split(root)
    x = jax.random.normal(x_key, (batch, seq_len, d_model), jnp.float32)
    params = init_encoder_params(p_key, num_layers, d_model, ffn_hidden, num_heads)

    out = encoder_forward(x, params, num_heads)
    out = jax.block_until_ready(out)
    assert out.shape == (batch, seq_len, d_model)
    assert bool(jnp.all(jnp.isfinite(out)))
    print("KERNEL_OK")
</pallas_src>

<mosaic_0001>
module attributes {stable_mosaic.version = 11 : i64} {
  func.func @encoder_layer_kernel(%arg0: i32, %arg1: i32, %arg2: memref<2x8x32xf32, #tpu.memory_space<vmem>>, %arg3: memref<1x32x96xbf16, #tpu.memory_space<vmem>>, %arg4: memref<1x1x96xf32, #tpu.memory_space<vmem>>, %arg5: memref<1x32x32xbf16, #tpu.memory_space<vmem>>, %arg6: memref<1x32x64xbf16, #tpu.memory_space<vmem>>, %arg7: memref<1x1x64xf32, #tpu.memory_space<vmem>>, %arg8: memref<1x64x32xbf16, #tpu.memory_space<vmem>>, %arg9: memref<1x8x32xf32, #tpu.memory_space<vmem>>, %arg10: memref<2x8x32xf32, #tpu.memory_space<vmem>>, %arg11: memref<2x8x32xf32, #tpu.memory_space<vmem>>) attributes {dimension_semantics = [#tpu.dimension_semantics<parallel>, #tpu.dimension_semantics<arbitrary>], iteration_bounds = array<i64: 1, 2>, scalar_prefetch = 0 : i64, scratch_operands = 1 : i64, tpu.core_type = #tpu.core_type<tc>, window_params = [{transform_indices = @transform_0, window_bounds = array<i64: 2, 8, 32>}, {transform_indices = @transform_1, window_bounds = array<i64: 1, 32, 96>}, {transform_indices = @transform_2, window_bounds = array<i64: 1, 1, 96>}, {transform_indices = @transform_3, window_bounds = array<i64: 1, 32, 32>}, {transform_indices = @transform_4, window_bounds = array<i64: 1, 32, 64>}, {transform_indices = @transform_5, window_bounds = array<i64: 1, 1, 64>}, {transform_indices = @transform_6, window_bounds = array<i64: 1, 64, 32>}, {transform_indices = @transform_7, window_bounds = array<i64: 1, 8, 32>}, {transform_indices = @transform_8, window_bounds = array<i64: 2, 8, 32>}]} {
    %c0_i32 = arith.constant 0 : i32
    %0 = arith.cmpi eq, %arg1, %c0_i32 : i32
    %1 = arith.extui %0 : i1 to i32
    %c0_i32_0 = arith.constant 0 : i32
    %2 = arith.cmpi ne, %1, %c0_i32_0 : i32
    scf.if %2 {
      %c0_46 = arith.constant 0 : index
      %c0_47 = arith.constant 0 : index
      %c0_48 = arith.constant 0 : index
      %132 = vector.load %arg2[%c0_46, %c0_47, %c0_48] : memref<2x8x32xf32, #tpu.memory_space<vmem>>, vector<2x8x32xf32>
      %c0_49 = arith.constant 0 : index
      %c0_50 = arith.constant 0 : index
      %c0_51 = arith.constant 0 : index
      %133 = vector.load %arg11[%c0_49, %c0_50, %c0_51] : memref<2x8x32xf32, #tpu.memory_space<vmem>>, vector<2x8x32xf32>
      tpu.vector_store %arg11[%c0_49, %c0_50, %c0_51], %132 {strides = array<i32>} : memref<2x8x32xf32, #tpu.memory_space<vmem>>, vector<2x8x32xf32>,
    } else {
    }
    %c0 = arith.constant 0 : index
    %c0_1 = arith.constant 0 : index
    %c0_2 = arith.constant 0 : index
    %3 = vector.load %arg11[%c0, %c0_1, %c0_2] : memref<2x8x32xf32, #tpu.memory_space<vmem>>, vector<2x8x32xf32>
    %4 = vector.shape_cast %3 : vector<2x8x32xf32> to vector<16x32xf32>
    %5 = arith.truncf %4 : vector<16x32xf32> to vector<16x32xbf16>
    %c0_3 = arith.constant 0 : index
    %c0_4 = arith.constant 0 : index
    %c0_5 = arith.constant 0 : index
    %6 = vector.load %arg9[%c0_3, %c0_4, %c0_5] : memref<1x8x32xf32, #tpu.memory_space<vmem>>, vector<1x8x32xf32>
    %7 = vector.shape_cast %6 : vector<1x8x32xf32> to vector<8x32xf32>
    %8 = vector.extract_strided_slice %7 {offsets = [0, 0], sizes = [1, 32], strides = [1, 1]} : vector<8x32xf32> to vector<1x32xf32>
    %9 = vector.extract_strided_slice %7 {offsets = [1, 0], sizes = [1, 32], strides = [1, 1]} : vector<8x32xf32> to vector<1x32xf32>
    %10 = vector.extract_strided_slice %7 {offsets = [2, 0], sizes = [1, 32], strides = [1, 1]} : vector<8x32xf32> to vector<1x32xf32>
    %11 = vector.extract_strided_slice %7 {offsets = [3, 0], sizes = [1, 32], strides = [1, 1]} : vector<8x32xf32> to vector<1x32xf32>
    %12 = vector.extract_strided_slice %7 {offsets = [4, 0], sizes = [1, 32], strides = [1, 1]} : vector<8x32xf32> to vector<1x32xf32>
    %13 = vector.extract_strided_slice %7 {offsets = [5, 0], sizes = [1, 32], strides = [1, 1]} : vector<8x32xf32> to vector<1x32xf32>
    %c0_6 = arith.constant 0 : index
    %c0_7 = arith.constant 0 : index
    %c0_8 = arith.constant 0 : index
    %14 = vector.load %arg3[%c0_6, %c0_7, %c0_8] : memref<1x32x96xbf16, #tpu.memory_space<vmem>>, vector<1x32x96xbf16>
    %15 = vector.shape_cast %14 : vector<1x32x96xbf16> to vector<32x96xbf16>
    %cst = arith.constant dense<0.000000e+00> : vector<16x96xf32>
    %16 = tpu.matmul %5, %15, %cst {dimension_numbers = #tpu.dot_dimension_numbers<[1], [0], [0], [1], [0, 0, 1, 1], [], []>} : vector<16x32xbf16>, vector<32x96xbf16>, vector<16x96xf32> -> vector<16x96xf32>
    %c0_9 = arith.constant 0 : index
    %c0_10 = arith.constant 0 : index
    %c0_11 = arith.constant 0 : index
    %17 = vector.load %arg4[%c0_9, %c0_10, %c0_11] : memref<1x1x96xf32, #tpu.memory_space<vmem>>, vector<1x1x96xf32>
    %18 = vector.shape_cast %17 : vector<1x1x96xf32> to vector<1x96xf32>
    %19 = vector.broadcast %18 : vector<1x96xf32> to vector<16x96xf32>
    %20 = arith.addf %16, %19 : vector<16x96xf32>
    %21 = arith.truncf %20 : vector<16x96xf32> to vector<16x96xbf16>
    %22 = vector.shape_cast %21 : vector<16x96xbf16> to vector<2x8x96xbf16>
    %23 = vector.extract_strided_slice %22 {offsets = [0, 0, 0], sizes = [2, 8, 24], strides = [1, 1, 1]} : vector<2x8x96xbf16> to vector<2x8x24xbf16>
    %24 = vector.extract_strided_slice %22 {offsets = [0, 0, 24], sizes = [2, 8, 24], strides = [1, 1, 1]} : vector<2x8x96xbf16> to vector<2x8x24xbf16>
    %25 = vector.extract_strided_slice %22 {offsets = [0, 0, 48], sizes = [2, 8, 24], strides = [1, 1, 1]} : vector<2x8x96xbf16> to vector<2x8x24xbf16>
    %26 = vector.extract_strided_slice %22 {offsets = [0, 0, 72], sizes = [2, 8, 24], strides = [1, 1, 1]} : vector<2x8x96xbf16> to vector<2x8x24xbf16>
    %27 = vector.shape_cast %23 : vector<2x8x24xbf16> to vector<1x2x8x24xbf16>
    %28 = vector.shape_cast %24 : vector<2x8x24xbf16> to vector<1x2x8x24xbf16>
    %29 = vector.shape_cast %25 : vector<2x8x24xbf16> to vector<1x2x8x24xbf16>
    %30 = vector.shape_cast %26 : vector<2x8x24xbf16> to vector<1x2x8x24xbf16>
    %31 = tpu.concatenate %27, %28, %29, %30 in 0 : vector<1x2x8x24xbf16>, vector<1x2x8x24xbf16>, vector<1x2x8x24xbf16>, vector<1x2x8x24xbf16> -> vector<4x2x8x24xbf16>
    %32 = vector.shape_cast %31 : vector<4x2x8x24xbf16> to vector<8x8x24xbf16>
    %33 = vector.extract_strided_slice %32 {offsets = [0, 0, 0], sizes = [8, 8, 8], strides = [1, 1, 1]} : vector<8x8x24xbf16> to vector<8x8x8xbf16>
    %34 = vector.extract_strided_slice %32 {offsets = [0, 0, 8], sizes = [8, 8, 8], strides = [1, 1, 1]} : vector<8x8x24xbf16> to vector<8x8x8xbf16>
    %35 = vector.extract_strided_slice %32 {offsets = [0, 0, 16], sizes = [8, 8, 8], strides = [1, 1, 1]} : vector<8x8x24xbf16> to vector<8x8x8xbf16>
    "tpu.trace_start"() <{level = 10 : i32, message = "gqd,gkd->gqk"}> : () -> ()
    %cst_12 = arith.constant dense<0.000000e+00> : vector<8x8x8xf32>
    %36 = tpu.matmul %33, %34, %cst_12 {dimension_numbers = #tpu.dot_dimension_numbers<[2], [2], [1], [1], [0, 0, 0, 1, 1, 1], [0], [0]>} : vector<8x8x8xbf16>, vector<8x8x8xbf16>, vector<8x8x8xf32> -> vector<8x8x8xf32>
    "tpu.trace_stop"() : () -> ()
    %cst_13 = arith.constant 0.353553385 : f32
    %37 = vector.broadcast %cst_13 : f32 to vector<8x8x8xf32>
    %38 = arith.mulf %36, %37 : vector<8x8x8xf32>
    %cst_14 = arith.constant dense<0xFF800000> : vector<8x8xf32>
    %39 = vector.multi_reduction <maximumf>, %38, %cst_14 [2] : vector<8x8x8xf32> to vector<8x8xf32>
    %40 = vector.shape_cast %39 : vector<8x8xf32> to vector<8x8x1xf32>
    %41 = vector.broadcast %40 : vector<8x8x1xf32> to vector<8x8x8xf32>
    %42 = arith.subf %38, %41 : vector<8x8x8xf32>
    %43 = math.exp %42 : vector<8x8x8xf32>
    %cst_15 = arith.constant dense<0.000000e+00> : vector<8x8xf32>
    %44 = vector.multi_reduction <add>, %43, %cst_15 [2] : vector<8x8x8xf32> to vector<8x8xf32>
    %45 = vector.shape_cast %44 : vector<8x8xf32> to vector<8x8x1xf32>
    %46 = tpu.reciprocal %45 {approx = true} : vector<8x8x1xf32> -> vector<8x8x1xf32>
    %47 = vector.broadcast %46 : vector<8x8x1xf32> to vector<8x8x8xf32>
    %48 = arith.mulf %43, %47 : vector<8x8x8xf32>
    %49 = arith.truncf %48 : vector<8x8x8xf32> to vector<8x8x8xbf16>
    "tpu.trace_start"() <{level = 10 : i32, message = "gqk,gkd->gqd"}> : () -> ()
    %cst_16 = arith.constant dense<0.000000e+00> : vector<8x8x8xf32>
    %50 = tpu.matmul %49, %35, %cst_16 {dimension_numbers = #tpu.dot_dimension_numbers<[2], [1], [1], [2], [0, 0, 0, 1, 1, 2], [0], [0]>} : vector<8x8x8xbf16>, vector<8x8x8xbf16>, vector<8x8x8xf32> -> vector<8x8x8xf32>
    "tpu.trace_stop"() : () -> ()
    %51 = vector.shape_cast %50 : vector<8x8x8xf32> to vector<4x16x8xf32>
    %52 = vector.extract_strided_slice %51 {offsets = [0, 0, 0], sizes = [1, 16, 8], strides = [1, 1, 1]} : vector<4x16x8xf32> to vector<1x16x8xf32>
    %53 = vector.shape_cast %52 : vector<1x16x8xf32> to vector<16x8xf32>
    %54 = vector.extract_strided_slice %51 {offsets = [1, 0, 0], sizes = [1, 16, 8], strides = [1, 1, 1]} : vector<4x16x8xf32> to vector<1x16x8xf32>
    %55 = vector.shape_cast %54 : vector<1x16x8xf32> to vector<16x8xf32>
    %56 = vector.extract_strided_slice %51 {offsets = [2, 0, 0], sizes = [1, 16, 8], strides = [1, 1, 1]} : vector<4x16x8xf32> to vector<1x16x8xf32>
    %57 = vector.shape_cast %56 : vector<1x16x8xf32> to vector<16x8xf32>
    %58 = vector.extract_strided_slice %51 {offsets = [3, 0, 0], sizes = [1, 16, 8], strides = [1, 1, 1]} : vector<4x16x8xf32> to vector<1x16x8xf32>
    %59 = vector.shape_cast %58 : vector<1x16x8xf32> to vector<16x8xf32>
    %60 = tpu.concatenate %53, %55, %57, %59 in 1 : vector<16x8xf32>, vector<16x8xf32>, vector<16x8xf32>, vector<16x8xf32> -> vector<16x32xf32>
    %61 = arith.truncf %60 : vector<16x32xf32> to vector<16x32xbf16>
    %c0_17 = arith.constant 0 : index
    %c0_18 = arith.constant 0 : index
    %c0_19 = arith.constant 0 : index
    %62 = vector.load %arg5[%c0_17, %c0_18, %c0_19] : memref<1x32x32xbf16, #tpu.memory_space<vmem>>, vector<1x32x32xbf16>
    %63 = vector.shape_cast %62 : vector<1x32x32xbf16> to vector<32x32xbf16>
    %cst_20 = arith.constant dense<0.000000e+00> : vector<16x32xf32>
    %64 = tpu.matmul %61, %63, %cst_20 {dimension_numbers = #tpu.dot_dimension_numbers<[1], [0], [0], [1], [0, 0, 1, 1], [], []>} : vector<16x32xbf16>, vector<32x32xbf16>, vector<16x32xf32> -> vector<16x32xf32>
    %65 = vector.broadcast %8 : vector<1x32xf32> to vector<16x32xf32>
    %66 = arith.addf %64, %65 : vector<16x32xf32>
    %67 = arith.addf %66, %4 : vector<16x32xf32>
    %cst_21 = arith.constant dense<0.000000e+00> : vector<16xf32>
    %68 = vector.multi_reduction <add>, %67, %cst_21 [1] : vector<16x32xf32> to vector<16xf32>
    %69 = vector.shape_cast %68 : vector<16xf32> to vector<16x1xf32>
    %cst_22 = arith.constant 3.200000e+01 : f32
    %70 = vector.broadcast %cst_22 : f32 to vector<16x1xf32>
    %71 = arith.divf %69, %70 : vector<16x1xf32>
    %72 = vector.broadcast %71 : vector<16x1xf32> to vector<16x32xf32>
    %73 = arith.subf %67, %72 : vector<16x32xf32>
    %74 = arith.mulf %73, %73 : vector<16x32xf32>
    %cst_23 = arith.constant dense<0.000000e+00> : vector<16xf32>
    %75 = vector.multi_reduction <add>, %74, %cst_23 [1] : vector<16x32xf32> to vector<16xf32>
    %76 = vector.shape_cast %75 : vector<16xf32> to vector<16x1xf32>
    %cst_24 = arith.constant 3.200000e+01 : f32
    %77 = vector.broadcast %cst_24 : f32 to vector<16x1xf32>
    %78 = arith.divf %76, %77 : vector<16x1xf32>
    %cst_25 = arith.constant 9.99999974E-6 : f32
    %79 = vector.broadcast %cst_25 : f32 to vector<16x1xf32>
    %80 = arith.addf %78, %79 : vector<16x1xf32>
    %81 = math.rsqrt %80 : vector<16x1xf32>
    %82 = vector.broadcast %81 : vector<16x1xf32> to vector<16x32xf32>
    %83 = arith.mulf %73, %82 : vector<16x32xf32>
    %84 = vector.broadcast %9 : vector<1x32xf32> to vector<16x32xf32>
    %85 = arith.mulf %83, %84 : vector<16x32xf32>
    %86 = vector.broadcast %10 : vector<1x32xf32> to vector<16x32xf32>
    %87 = arith.addf %85, %86 : vector<16x32xf32>
    %88 = arith.truncf %87 : vector<16x32xf32> to vector<16x32xbf16>
    %c0_26 = arith.constant 0 : index
    %c0_27 = arith.constant 0 : index
    %c0_28 = arith.constant 0 : index
    %89 = vector.load %arg6[%c0_26, %c0_27, %c0_28] : memref<1x32x64xbf16, #tpu.memory_space<vmem>>, vector<1x32x64xbf16>
    %90 = vector.shape_cast %89 : vector<1x32x64xbf16> to vector<32x64xbf16>
    %cst_29 = arith.constant dense<0.000000e+00> : vector<16x64xf32>
    %91 = tpu.matmul %88, %90, %cst_29 {dimension_numbers = #tpu.dot_dimension_numbers<[1], [0], [0], [1], [0, 0, 1, 1], [], []>} : vector<16x32xbf16>, vector<32x64xbf16>, vector<16x64xf32> -> vector<16x64xf32>
    %c0_30 = arith.constant 0 : index
    %c0_31 = arith.constant 0 : index
    %c0_32 = arith.constant 0 : index
    %92 = vector.load %arg7[%c0_30, %c0_31, %c0_32] : memref<1x1x64xf32, #tpu.memory_space<vmem>>, vector<1x1x64xf32>
    %93 = vector.shape_cast %92 : vector<1x1x64xf32> to vector<1x64xf32>
    %94 = vector.broadcast %93 : vector<1x64xf32> to vector<16x64xf32>
    %95 = arith.addf %91, %94 : vector<16x64xf32>
    %cst_33 = arith.constant 0.000000e+00 : f32
    %96 = vector.broadcast %cst_33 : f32 to vector<16x64xf32>
    %97 = arith.maximumf %95, %96 : vector<16x64xf32>
    %98 = arith.truncf %97 : vector<16x64xf32> to vector<16x64xbf16>
    %c0_34 = arith.constant 0 : index
    %c0_35 = arith.constant 0 : index
    %c0_36 = arith.constant 0 : index
    %99 = vector.load %arg8[%c0_34, %c0_35, %c0_36] : memref<1x64x32xbf16, #tpu.memory_space<vmem>>, vector<1x64x32xbf16>
    %100 = vector.shape_cast %99 : vector<1x64x32xbf16> to vector<64x32xbf16>
    %cst_37 = arith.constant dense<0.000000e+00> : vector<16x32xf32>
    %101 = tpu.matmul %98, %100, %cst_37 {dimension_numbers = #tpu.dot_dimension_numbers<[1], [0], [0], [1], [0, 0, 1, 1], [], []>} : vector<16x64xbf16>, vector<64x32xbf16>, vector<16x32xf32> -> vector<16x32xf32>
    %102 = vector.broadcast %11 : vector<1x32xf32> to vector<16x32xf32>
    %103 = arith.addf %101, %102 : vector<16x32xf32>
    %104 = arith.addf %103, %87 : vector<16x32xf32>
    %cst_38 = arith.constant dense<0.000000e+00> : vector<16xf32>
    %105 = vector.multi_reduction <add>, %104, %cst_38 [1] : vector<16x32xf32> to vector<16xf32>
    %106 = vector.shape_cast %105 : vector<16xf32> to vector<16x1xf32>
    %cst_39 = arith.constant 3.200000e+01 : f32
    %107 = vector.broadcast %cst_39 : f32 to vector<16x1xf32>
    %108 = arith.divf %106, %107 : vector<16x1xf32>
    %109 = vector.broadcast %108 : vector<16x1xf32> to vector<16x32xf32>
    %110 = arith.subf %104, %109 : vector<16x32xf32>
    %111 = arith.mulf %110, %110 : vector<16x32xf32>
    %cst_40 = arith.constant dense<0.000000e+00> : vector<16xf32>
    %112 = vector.multi_reduction <add>, %111, %cst_40 [1] : vector<16x32xf32> to vector<16xf32>
    %113 = vector.shape_cast %112 : vector<16xf32> to vector<16x1xf32>
    %cst_41 = arith.constant 3.200000e+01 : f32
    %114 = vector.broadcast %cst_41 : f32 to vector<16x1xf32>
    %115 = arith.divf %113, %114 : vector<16x1xf32>
    %cst_42 = arith.constant 9.99999974E-6 : f32
    %116 = vector.broadcast %cst_42 : f32 to vector<16x1xf32>
    %117 = arith.addf %115, %116 : vector<16x1xf32>
    %118 = math.rsqrt %117 : vector<16x1xf32>
    %119 = vector.broadcast %118 : vector<16x1xf32> to vector<16x32xf32>
    %120 = arith.mulf %110, %119 : vector<16x32xf32>
    %121 = vector.broadcast %12 : vector<1x32xf32> to vector<16x32xf32>
    %122 = arith.mulf %120, %121 : vector<16x32xf32>
    %123 = vector.broadcast %13 : vector<1x32xf32> to vector<16x32xf32>
    %124 = arith.addf %122, %123 : vector<16x32xf32>
    %125 = vector.shape_cast %124 : vector<16x32xf32> to vector<2x8x32xf32>
    %c1_i32 = arith.constant 1 : i32
    %126 = arith.cmpi slt, %arg1, %c1_i32 : i32
    %127 = arith.extui %126 : i1 to i32
    %c0_i32_43 = arith.constant 0 : i32
    %128 = arith.cmpi ne, %127, %c0_i32_43 : i32
    scf.if %128 {
      %c0_46 = arith.constant 0 : index
      %c0_47 = arith.constant 0 : index
      %c0_48 = arith.constant 0 : index
      %132 = vector.load %arg11[%c0_46, %c0_47, %c0_48] : memref<2x8x32xf32, #tpu.memory_space<vmem>>, vector<2x8x32xf32>
      tpu.vector_store %arg11[%c0_46, %c0_47, %c0_48], %125 {strides = array<i32>} : memref<2x8x32xf32, #tpu.memory_space<vmem>>, vector<2x8x32xf32>,
    } else {
    }
    %c1_i32_44 = arith.constant 1 : i32
    %129 = arith.cmpi eq, %arg1, %c1_i32_44 : i32
    %130 = arith.extui %129 : i1 to i32
    %c0_i32_45 = arith.constant 0 : i32
    %131 = arith.cmpi ne, %130, %c0_i32_45 : i32
    scf.if %131 {
      %c0_46 = arith.constant 0 : index
      %c0_47 = arith.constant 0 : index
      %c0_48 = arith.constant 0 : index
      %132 = vector.load %arg10[%c0_46, %c0_47, %c0_48] : memref<2x8x32xf32, #tpu.memory_space<vmem>>, vector<2x8x32xf32>
      tpu.vector_store %arg10[%c0_46, %c0_47, %c0_48], %125 {strides = array<i32>} : memref<2x8x32xf32, #tpu.memory_space<vmem>>, vector<2x8x32xf32>,
    } else {
    }
    return
  }
  func.func @transform_0(%arg0: i32, %arg1: i32) -> (i32, i32, i32) {
    %c0_i32 = arith.constant 0 : i32
    %c0_i32_0 = arith.constant 0 : i32
    %c0_i32_1 = arith.constant 0 : i32
    return %arg0, %c0_i32, %c0_i32_0 : i32, i32, i32
  }
  func.func @transform_1(%arg0: i32, %arg1: i32) -> (i32, i32, i32) {
    %c0_i32 = arith.constant 0 : i32
    %c0_i32_0 = arith.constant 0 : i32
    %c0_i32_1 = arith.constant 0 : i32
    return %arg1, %c0_i32, %c0_i32_0 : i32, i32, i32
  }
  func.func @transform_2(%arg0: i32, %arg1: i32) -> (i32, i32, i32) {
    %c0_i32 = arith.constant 0 : i32
    %c0_i32_0 = arith.constant 0 : i32
    %c0_i32_1 = arith.constant 0 : i32
    return %arg1, %c0_i32, %c0_i32_0 : i32, i32, i32
  }
  func.func @transform_3(%arg0: i32, %arg1: i32) -> (i32, i32, i32) {
    %c0_i32 = arith.constant 0 : i32
    %c0_i32_0 = arith.constant 0 : i32
    %c0_i32_1 = arith.constant 0 : i32
    return %arg1, %c0_i32, %c0_i32_0 : i32, i32, i32
  }
  func.func @transform_4(%arg0: i32, %arg1: i32) -> (i32, i32, i32) {
    %c0_i32 = arith.constant 0 : i32
    %c0_i32_0 = arith.constant 0 : i32
    %c0_i32_1 = arith.constant 0 : i32
    return %arg1, %c0_i32, %c0_i32_0 : i32, i32, i32
  }
  func.func @transform_5(%arg0: i32, %arg1: i32) -> (i32, i32, i32) {
    %c0_i32 = arith.constant 0 : i32
    %c0_i32_0 = arith.constant 0 : i32
    %c0_i32_1 = arith.constant 0 : i32
    return %arg1, %c0_i32, %c0_i32_0 : i32, i32, i32
  }
  func.func @transform_6(%arg0: i32, %arg1: i32) -> (i32, i32, i32) {
    %c0_i32 = arith.constant 0 : i32
    %c0_i32_0 = arith.constant 0 : i32
    %c0_i32_1 = arith.constant 0 : i32
    return %arg1, %c0_i32, %c0_i32_0 : i32, i32, i32
  }
  func.func @transform_7(%arg0: i32, %arg1: i32) -> (i32, i32, i32) {
    %c0_i32 = arith.constant 0 : i32
    %c0_i32_0 = arith.constant 0 : i32
    %c0_i32_1 = arith.constant 0 : i32
    return %arg1, %c0_i32, %c0_i32_0 : i32, i32, i32
  }
  func.func @transform_8(%arg0: i32, %arg1: i32) -> (i32, i32, i32) {
    %c0_i32 = arith.constant 0 : i32
    %c0_i32_0 = arith.constant 0 : i32
    %c0_i32_1 = arith.constant 0 : i32
    return %arg0, %c0_i32, %c0_i32_0 : i32, i32, i32
  }
}

</mosaic_0001>

<llo_original>
// kernel: tpu_custom_call.1
$region0: #{tpu_custom_call.1}
  #allocation0 [shape = 'u32[]', space=smem, size = 0x4, offset = 0x4, fixed_abs, tag = 'smem constant byte address 0x4 - core index']
  #allocation1 [shape = 'u32[144,128]{1,0:T(1,128)}', space=vmem, size = 0x12000, scoped, tag = 'internal scratch']
  #allocation2 [shape = 'f32[2,8,32]{2,1,0:T(8,128)}', space=vmem, size = 0x2000, scoped, tag = 'scratch operand']
  %s0 = inlined_call_operand.hbm [shape: f32[2,8,32], index: 0, kind: input, shape index: {}]
  %s1 = inlined_call_operand.vmem [shape: bf16[2,32,96], index: 1, kind: input, shape index: {}]
  %s2 = inlined_call_operand.vmem [shape: f32[2,1,96], index: 2, kind: input, shape index: {}]
  %s3 = inlined_call_operand.vmem [shape: bf16[2,32,32], index: 3, kind: input, shape index: {}]
  %s4 = inlined_call_operand.vmem [shape: bf16[2,32,64], index: 4, kind: input, shape index: {}]
  %s5 = inlined_call_operand.vmem [shape: f32[2,1,64], index: 5, kind: input, shape index: {}]
  %s6 = inlined_call_operand.vmem [shape: bf16[2,64,32], index: 6, kind: input, shape index: {}]
  %s7 = inlined_call_operand.hbm [shape: f32[2,8,32], index: 7, kind: input, shape index: {}]
  %s8 = inlined_call_operand.hbm [shape: f32[2,8,32], index: 8, kind: output, shape index: {}]
  %s9 = sld [smem:[#allocation0]]
  $region85: #{tpu_custom_call.1} parent=0
    _
  %s11 = ssub.s32 1, %s9
  %s12 = scalar_select 0, %s11, %s9
  $region1: #{tpu_custom_call.1} parent=0
    #allocation3 [shape = 'u8[8192]{0}', space=vmem, size = 0x2000, scoped, tag = 'input window, operand 0, single buffered']
    #allocation4 [shape = 's32[2]{0}', space=sflag, size = 0x8, scoped, tag = 'scoped memory for tpu_custom_call.1']
    #allocation5 [shape = 's32[2]{0}', space=sflag, size = 0x8, scoped, tag = 'scoped memory for tpu_custom_call.1']
    #allocation6 [shape = 'u8[8192]{0}', space=vmem, size = 0x2000, scoped, tag = 'input window, operand 7']
    #allocation7 [shape = 's32[2]{0}', space=sflag, size = 0x8, scoped, tag = 'scoped memory for tpu_custom_call.1']
    #allocation8 [shape = 'u8[8192]{0}', space=vmem, size = 0x2000, scoped, tag = 'output window, operand 0, single buffered']
    %13 = vsyncpa [#allocation4], 0
    %14 = vsyncpa [#allocation7], 0
    %s15 = scalar_lea.sflag [#allocation7], 1
    %16 = vsyncpa %s15, 0
    %17 = vsyncpa [#allocation5], 0
    loop: start=0, step=1, limit=4
    $region2: #{tpu_custom_call.1} parent=1 // loop_pre_header
      _
    $region3: #{tpu_custom_call.1} parent=1 // loop_header
      %s19 = sphi 0, %s23
      %p20 = scmp.ge.s32.totalorder %s19, 4
      %s26 = sphi 0, %s38
      %s27 = sphi 0, %s34
      %s28 = sphi 0, %s26
      %s29 = sphi 0, %s27
      %s30 = sphi 0, %s28
      %s31 = sphi 0, %s29
      %s41 = sphi 0, %s43
      %s44 = sphi 0, %s41
      %s45 = sphi 0, %s44
      %s61 = sphi 0, %s45
      %s67 = sphi 0, %s69
      %s70 = sphi 0, %s67
      %s71 = sphi 0, %s70
      %s87 = sphi 0, %s71
      %s93 = sphi 0, %s95
      %s96 = sphi 0, %s93
      %s97 = sphi 0, %s96
      %s113 = sphi 0, %s97
      %s119 = sphi 0, %s121
      %s122 = sphi 0, %s119
      %s123 = sphi 0, %s122
      %s139 = sphi 0, %s123
      %s145 = sphi 0, %s147
      %s148 = sphi 0, %s145
      %s149 = sphi 0, %s148
      %s165 = sphi 0, %s149
      %s171 = sphi 0, %s173
      %s174 = sphi 0, %s171
      %s175 = sphi 0, %s174
      %s191 = sphi 0, %s175
      %s197 = sphi 0, %s199
      %s200 = sphi 0, %s197
      %s201 = sphi 0, %s200
      %s217 = sphi 0, %s201
      %s223 = sphi 0, %s225
      %s226 = sphi 0, %s223
      %s227 = sphi 0, %s226
      %s243 = sphi 0, %s227
      %s249 = sphi 0, %s251
      %s252 = sphi 0, %s249
      %s253 = sphi 0, %s252
      %s269 = sphi 0, %s253
    $region4: #{tpu_custom_call.1} parent=1 // loop_header_branch
      %22 = sbr.rel (%p20) target = $region8
    $region5: #{tpu_custom_call.1} parent=1 // loop_body
      %s24 = ssub.s32 %s19, 1
      %s25 = ssub.s32 %s19, 2
      %s32 = sadd.s32 1, %s27
      %p33 = scmp.ge.s32.totalorder %s32, 2
      %s34 = scalar_select %p33, 0, %s32
      %s35 = sadd.s32 1, %s26
      %s36 = scalar_select %p33, %s35, %s26
      %p37 = scmp.ge.s32.totalorder %s36, 1
      %s38 = scalar_select %p37, 0, %s36
      %s39 = ssub.s32 %s26, %s38
      %p40 = scmp.eq.s32.totalorder %s39, 0
      %s42 = sadd.s32 %s41, 1
      %s43 = scalar_select %p40, %s41, %s42
      %p46 = pneg %p40
      %p47 = scmp.eq.s32.totalorder %s19, 1
      %p48 = por %p46, %p47
      %p49 = scmp.ne.s32.totalorder %s41, %s44
      %p50 = scmp.eq.s32.totalorder %s19, 0
      %p51 = por %p49, %p50
      %p52 = scmp.ne.s32.totalorder %s41, %s44
      %p53 = scmp.eq.s32.totalorder %s24, 1
      %p54 = por %p52, %p53
      %p55 = scmp.ne.s32.totalorder %s44, %s45
      %p56 = scmp.eq.s32.totalorder %s24, 0
      %p57 = por %p55, %p56
      %p58 = scmp.ne.s32.totalorder %s44, %s45
      %p59 = scmp.eq.s32.totalorder %s25, 1
      %p60 = por %p58, %p59
      %p62 = scmp.ne.s32.totalorder %s45, %s61
      %p63 = scmp.eq.s32.totalorder %s25, 0
      %p64 = por %p62, %p63
      %s65 = ssub.s32 %s27, %s34
      %p66 = scmp.eq.s32.totalorder %s65, 0
      %s68 = sadd.s32 %s67, 1
      %s69 = scalar_select %p66, %s67, %s68
      %p72 = pneg %p66
      %p73 = scmp.eq.s32.totalorder %s19, 1
      %p74 = por %p72, %p73
      %p75 = scmp.ne.s32.totalorder %s67, %s70
      %p76 = scmp.eq.s32.totalorder %s19, 0
      %p77 = por %p75, %p76
      %p78 = scmp.ne.s32.totalorder %s67, %s70
      %p79 = scmp.eq.s32.totalorder %s24, 1
      %p80 = por %p78, %p79
      %p81 = scmp.ne.s32.totalorder %s70, %s71
      %p82 = scmp.eq.s32.totalorder %s24, 0
      %p83 = por %p81, %p82
      %p84 = scmp.ne.s32.totalorder %s70, %s71
      %p85 = scmp.eq.s32.totalorder %s25, 1
      %p86 = por %p84, %p85
      %p88 = scmp.ne.s32.totalorder %s71, %s87
      %p89 = scmp.eq.s32.totalorder %s25, 0
      %p90 = por %p88, %p89
      %s91 = ssub.s32 %s27, %s34
      %p92 = scmp.eq.s32.totalorder %s91, 0
      %s94 = sadd.s32 %s93, 1
      %s95 = scalar_select %p92, %s93, %s94
      %p98 = pneg %p92
      %p99 = scmp.eq.s32.totalorder %s19, 1
      %p100 = por %p98, %p99
      %p101 = scmp.ne.s32.totalorder %s93, %s96
      %p102 = scmp.eq.s32.totalorder %s19, 0
      %p103 = por %p101, %p102
      %p104 = scmp.ne.s32.totalorder %s93, %s96
      %p105 = scmp.eq.s32.totalorder %s24, 1
      %p106 = por %p104, %p105
      %p107 = scmp.ne.s32.totalorder %s96, %s97
      %p108 = scmp.eq.s32.totalorder %s24, 0
      %p109 = por %p107, %p108
      %p110 = scmp.ne.s32.totalorder %s96, %s97
      %p111 = scmp.eq.s32.totalorder %s25, 1
      %p112 = por %p110, %p111
      %p114 = scmp.ne.s32.totalorder %s97, %s113
      %p115 = scmp.eq.s32.totalorder %s25, 0
      %p116 = por %p114, %p115
      %s117 = ssub.s32 %s27, %s34
      %p118 = scmp.eq.s32.totalorder %s117, 0
      %s120 = sadd.s32 %s119, 1
      %s121 = scalar_select %p118, %s119, %s120
      %p124 = pneg %p118
      %p125 = scmp.eq.s32.totalorder %s19, 1
      %p126 = por %p124, %p125
      %p127 = scmp.ne.s32.totalorder %s119, %s122
      %p128 = scmp.eq.s32.totalorder %s19, 0
      %p129 = por %p127, %p128
      %p130 = scmp.ne.s32.totalorder %s119, %s122
      %p131 = scmp.eq.s32.totalorder %s24, 1
      %p132 = por %p130, %p131
      %p133 = scmp.ne.s32.totalorder %s122, %s123
      %p134 = scmp.eq.s32.totalorder %s24, 0
      %p135 = por %p133, %p134
      %p136 = scmp.ne.s32.totalorder %s122, %s123
      %p137 = scmp.eq.s32.totalorder %s25, 1
      %p138 = por %p136, %p137
      %p140 = scmp.ne.s32.totalorder %s123, %s139
      %p141 = scmp.eq.s32.totalorder %s25, 0
      %p142 = por %p140, %p141
      %s143 = ssub.s32 %s27, %s34
      %p144 = scmp.eq.s32.totalorder %s143, 0
      %s146 = sadd.s32 %s145, 1
      %s147 = scalar_select %p144, %s145, %s146
      %p150 = pneg %p144
      %p151 = scmp.eq.s32.totalorder %s19, 1
      %p152 = por %p150, %p151
      %p153 = scmp.ne.s32.totalorder %s145, %s148
      %p154 = scmp.eq.s32.totalorder %s19, 0
      %p155 = por %p153, %p154
      %p156 = scmp.ne.s32.totalorder %s145, %s148
      %p157 = scmp.eq.s32.totalorder %s24, 1
      %p158 = por %p156, %p157
      %p159 = scmp.ne.s32.totalorder %s148, %s149
      %p160 = scmp.eq.s32.totalorder %s24, 0
      %p161 = por %p159, %p160
      %p162 = scmp.ne.s32.totalorder %s148, %s149
      %p163 = scmp.eq.s32.totalorder %s25, 1
      %p164 = por %p162, %p163
      %p166 = scmp.ne.s32.totalorder %s149, %s165
      %p167 = scmp.eq.s32.totalorder %s25, 0
      %p168 = por %p166, %p167
      %s169 = ssub.s32 %s27, %s34
      %p170 = scmp.eq.s32.totalorder %s169, 0
      %s172 = sadd.s32 %s171, 1
      %s173 = scalar_select %p170, %s171, %s172
      %p176 = pneg %p170
      %p177 = scmp.eq.s32.totalorder %s19, 1
      %p178 = por %p176, %p177
      %p179 = scmp.ne.s32.totalorder %s171, %s174
      %p180 = scmp.eq.s32.totalorder %s19, 0
      %p181 = por %p179, %p180
      %p182 = scmp.ne.s32.totalorder %s171, %s174
      %p183 = scmp.eq.s32.totalorder %s24, 1
      %p184 = por %p182, %p183
      %p185 = scmp.ne.s32.totalorder %s174, %s175
      %p186 = scmp.eq.s32.totalorder %s24, 0
      %p187 = por %p185, %p186
      %p188 = scmp.ne.s32.totalorder %s174, %s175
      %p189 = scmp.eq.s32.totalorder %s25, 1
      %p190 = por %p188, %p189
      %p192 = scmp.ne.s32.totalorder %s175, %s191
      %p193 = scmp.eq.s32.totalorder %s25, 0
      %p194 = por %p192, %p193
      %s195 = ssub.s32 %s27, %s34
      %p196 = scmp.eq.s32.totalorder %s195, 0
      %s198 = sadd.s32 %s197, 1
      %s199 = scalar_select %p196, %s197, %s198
      %p202 = pneg %p196
      %p203 = scmp.eq.s32.totalorder %s19, 1
      %p204 = por %p202, %p203
      %p205 = scmp.ne.s32.totalorder %s197, %s200
      %p206 = scmp.eq.s32.totalorder %s19, 0
      %p207 = por %p205, %p206
      %p208 = scmp.ne.s32.totalorder %s197, %s200
      %p209 = scmp.eq.s32.totalorder %s24, 1
      %p210 = por %p208, %p209
      %p211 = scmp.ne.s32.totalorder %s200, %s201
      %p212 = scmp.eq.s32.totalorder %s24, 0
      %p213 = por %p211, %p212
      %p214 = scmp.ne.s32.totalorder %s200, %s201
      %p215 = scmp.eq.s32.totalorder %s25, 1
      %p216 = por %p214, %p215
      %p218 = scmp.ne.s32.totalorder %s201, %s217
      %p219 = scmp.eq.s32.totalorder %s25, 0
      %p220 = por %p218, %p219
      %s221 = ssub.s32 %s27, %s34
      %p222 = scmp.eq.s32.totalorder %s221, 0
      %s224 = sadd.s32 %s223, 1
      %s225 = scalar_select %p222, %s223, %s224
      %p228 = pneg %p222
      %p229 = scmp.eq.s32.totalorder %s19, 1
      %p230 = por %p228, %p229
      %p231 = scmp.ne.s32.totalorder %s223, %s226
      %p232 = scmp.eq.s32.totalorder %s19, 0
      %p233 = por %p231, %p232
      %p234 = scmp.ne.s32.totalorder %s223, %s226
      %p235 = scmp.eq.s32.totalorder %s24, 1
      %p236 = por %p234, %p235
      %p237 = scmp.ne.s32.totalorder %s226, %s227
      %p238 = scmp.eq.s32.totalorder %s24, 0
      %p239 = por %p237, %p238
      %p240 = scmp.ne.s32.totalorder %s226, %s227
      %p241 = scmp.eq.s32.totalorder %s25, 1
      %p242 = por %p240, %p241
      %p244 = scmp.ne.s32.totalorder %s227, %s243
      %p245 = scmp.eq.s32.totalorder %s25, 0
      %p246 = por %p244, %p245
      %s247 = ssub.s32 %s26, %s38
      %p248 = scmp.eq.s32.totalorder %s247, 0
      %s250 = sadd.s32 %s249, 1
      %s251 = scalar_select %p248, %s249, %s250
      %p254 = pneg %p248
      %p255 = scmp.eq.s32.totalorder %s19, 1
      %p256 = por %p254, %p255
      %p257 = scmp.ne.s32.totalorder %s249, %s252
      %p258 = scmp.eq.s32.totalorder %s19, 0
      %p259 = por %p257, %p258
      %p260 = scmp.ne.s32.totalorder %s249, %s252
      %p261 = scmp.eq.s32.totalorder %s24, 1
      %p262 = por %p260, %p261
      %p263 = scmp.ne.s32.totalorder %s252, %s253
      %p264 = scmp.eq.s32.totalorder %s24, 0
      %p265 = por %p263, %p264
      %p266 = scmp.ne.s32.totalorder %s252, %s253
      %p267 = scmp.eq.s32.totalorder %s25, 1
      %p268 = por %p266, %p267
      %p270 = scmp.ne.s32.totalorder %s253, %s269
      %p271 = scmp.eq.s32.totalorder %s25, 0
      %p272 = por %p270, %p271
      %p273 = scmp.le.s32.totalorder 1, %s19
      %p274 = scmp.lt.s32.totalorder %s19, 3
      %p275 = pnand %p273, %p274
      %p276 = pneg %p275
      // Predicated region
      $region9: #{tpu_custom_call.1} parent=5 // pred_check
        _
      $region10: #{tpu_custom_call.1} parent=5 // pred_check_branch
        %278 = sbr.rel (%p275) target = $region12
      $region11: #{tpu_custom_call.1} parent=5 // pred_region
        %s279 = ssub.s32 %s19, 1
        // Predicated region
        $region13: #{tpu_custom_call.1} parent=11 // pred_check
          %p280 = pneg %p57
        $region14: #{tpu_custom_call.1} parent=11 // pred_check_branch
          %282 = sbr.rel (%p280) target = $region16
        $region15: #{tpu_custom_call.1} parent=11 // pred_region
          %s283 = smul.u32 2, %s28
          %s285 = ssub.s32 256, 256
          %286 = vsyncadd [#allocation4], %s285
          %s287 = smul.addr %s283, 128
          %s288 = scalar_lea.hbm %s0, %s287
          %s289 = sshll.u32 [#allocation3], 4
          %s290 = int_to_ptr.vmem [resolvable:$true] %s289
          %295 = dma.hbm_to_vmem [thread:$0]  %s288, 256, %s290, [#allocation4], 128, 128, 8
        $region16: #{tpu_custom_call.1} parent=11 // pred_fallthru
          _
      $region12: #{tpu_custom_call.1} parent=5 // pred_fallthru
        _
      %p296 = scmp.lt.s32.totalorder %s19, 2
      // Predicated region
      $region17: #{tpu_custom_call.1} parent=5 // pred_check
        %p297 = pneg %p296
      $region18: #{tpu_custom_call.1} parent=5 // pred_check_branch
        %299 = sbr.rel (%p297) target = $region20
      $region19: #{tpu_custom_call.1} parent=5 // pred_region
        // Predicated region
        $region21: #{tpu_custom_call.1} parent=19 // pred_check
          %p300 = pneg %p77
        $region22: #{tpu_custom_call.1} parent=19 // pred_check_branch
          %302 = sbr.rel (%p300) target = $region24
        $region23: #{tpu_custom_call.1} parent=19 // pred_region
          %p303 = scmp.lt.s32.totalorder %s27, 1
          %s304 = scalar_select %p303, %s27, 1
          %s305 = smul.addr %s304, 4
          %s306 = smul.addr %s305, 4
          %s307 = scalar_lea.vmem %s1, %s306
        $region24: #{tpu_custom_call.1} parent=19 // pred_fallthru
          _
        // Predicated region
        $region25: #{tpu_custom_call.1} parent=19 // pred_check
          %p308 = pneg %p103
        $region26: #{tpu_custom_call.1} parent=19 // pred_check_branch
          %310 = sbr.rel (%p308) target = $region28
        $region27: #{tpu_custom_call.1} parent=19 // pred_region
          %p311 = scmp.lt.s32.totalorder %s27, 1
          %s312 = scalar_select %p311, %s27, 1
          %s313 = scalar_lea.vmem %s2, %s312
        $region28: #{tpu_custom_call.1} parent=19 // pred_fallthru
          _
        // Predicated region
        $region29: #{tpu_custom_call.1} parent=19 // pred_check
          %p314 = pneg %p129
        $region30: #{tpu_custom_call.1} parent=19 // pred_check_branch
          %316 = sbr.rel (%p314) target = $region32
        $region31: #{tpu_custom_call.1} parent=19 // pred_region
          %p317 = scmp.lt.s32.totalorder %s27, 1
          %s318 = scalar_select %p317, %s27, 1
          %s319 = smul.addr %s318, 4
          %s320 = smul.addr %s319, 4
          %s321 = scalar_lea.vmem %s3, %s320
        $region32: #{tpu_custom_call.1} parent=19 // pred_fallthru
          _
        // Predicated region
        $region33: #{tpu_custom_call.1} parent=19 // pred_check
          %p322 = pneg %p155
        $region34: #{tpu_custom_call.1} parent=19 // pred_check_branch
          %324 = sbr.rel (%p322) target = $region36
        $region35: #{tpu_custom_call.1} parent=19 // pred_region
          %p325 = scmp.lt.s32.totalorder %s27, 1
          %s326 = scalar_select %p325, %s27, 1
          %s327 = smul.addr %s326, 4
          %s328 = smul.addr %s327, 4
          %s329 = scalar_lea.vmem %s4, %s328
        $region36: #{tpu_custom_call.1} parent=19 // pred_fallthru
          _
        // Predicated region
        $region37: #{tpu_custom_call.1} parent=19 // pred_check
          %p330 = pneg %p181
        $region38: #{tpu_custom_call.1} parent=19 // pred_check_branch
          %332 = sbr.rel (%p330) target = $region40
        $region39: #{tpu_custom_call.1} parent=19 // pred_region
          %p333 = scmp.lt.s32.totalorder %s27, 1
          %s334 = scalar_select %p333, %s27, 1
          %s335 = scalar_lea.vmem %s5, %s334
        $region40: #{tpu_custom_call.1} parent=19 // pred_fallthru
          _
        // Predicated region
        $region41: #{tpu_custom_call.1} parent=19 // pred_check
          %p336 = pneg %p207
        $region42: #{tpu_custom_call.1} parent=19 // pred_check_branch
          %338 = sbr.rel (%p336) target = $region44
        $region43: #{tpu_custom_call.1} parent=19 // pred_region
          %p339 = scmp.lt.s32.totalorder %s27, 1
          %s340 = scalar_select %p339, %s27, 1
          %s341 = smul.addr %s340, 8
          %s342 = smul.addr %s341, 4
          %s343 = scalar_lea.vmem %s6, %s342
        $region44: #{tpu_custom_call.1} parent=19 // pred_fallthru
          _
        // Predicated region
        $region45: #{tpu_custom_call.1} parent=19 // pred_check
          %p344 = pneg %p233
        $region46: #{tpu_custom_call.1} parent=19 // pred_check_branch
          %346 = sbr.rel (%p344) target = $region48
        $region47: #{tpu_custom_call.1} parent=19 // pred_region
          %s347 = sand.u32 %s223, 1
          %s348 = scalar_lea.sflag [#allocation7], %s347
          %s349 = sand.u32 %s223, 1
          %s350 = smul.addr %s349, 8
          %s351 = scalar_lea.vmem [#allocation6], %s350
          %s353 = ssub.s32 128, 128
          %354 = vsyncadd %s348, %s353
          %s355 = smul.addr %s27, 128
          %s356 = scalar_lea.hbm %s7, %s355
          %s358 = sshll.u32 %s351, 4
          %s359 = int_to_ptr.vmem [resolvable:$true] %s358
          %361 = dma.hbm_to_vmem [thread:$0]  %s356, 128, %s359, %s348
        $region48: #{tpu_custom_call.1} parent=19 // pred_fallthru
          _
      $region20: #{tpu_custom_call.1} parent=5 // pred_fallthru
        _
      %p362 = scmp.le.s32.totalorder 1, %s19
      %p363 = scmp.lt.s32.totalorder %s19, 3
      %p364 = pnand %p362, %p363
      %p365 = pneg %p364
      // Predicated region
      $region49: #{tpu_custom_call.1} parent=5 // pred_check
        _
      $region50: #{tpu_custom_call.1} parent=5 // pred_check_branch
        %367 = sbr.rel (%p364) target = $region52
      $region51: #{tpu_custom_call.1} parent=5 // pred_region
        %s368 = ssub.s32 %s19, 1
        // Predicated region
        $region53: #{tpu_custom_call.1} parent=51 // pred_check
          %p369 = pneg %p57
        $region54: #{tpu_custom_call.1} parent=51 // pred_check_branch
          %371 = sbr.rel (%p369) target = $region56
        $region55: #{tpu_custom_call.1} parent=51 // pred_region
          %372 = dma.done [#allocation4], 256
        $region56: #{tpu_custom_call.1} parent=51 // pred_fallthru
          _
        %s373 = sand.u32 %s226, 1
        %s374 = scalar_lea.sflag [#allocation7], %s373
        %s375 = sand.u32 %s226, 1
        %s376 = smul.addr %s375, 8
        %s377 = scalar_lea.vmem [#allocation6], %s376
        // Predicated region
        $region57: #{tpu_custom_call.1} parent=51 // pred_check
          %p378 = pneg %p239
        $region58: #{tpu_custom_call.1} parent=51 // pred_check_branch
          %380 = sbr.rel (%p378) target = $region60
        $region59: #{tpu_custom_call.1} parent=51 // pred_region
          %381 = dma.done %s374, 128
        $region60: #{tpu_custom_call.1} parent=51 // pred_fallthru
          _
        %p382 = pneg %p57
        %p383 = pneg %p54
        %p384 = scmp.lt.s32.totalorder %s29, 1
        %s385 = scalar_select %p384, %s29, 1
        %s386 = smul.addr %s385, 4
        %s387 = smul.addr %s386, 4
        %s388 = scalar_lea.vmem %s1, %s387
        %p389 = pneg %p83
        %p390 = pneg %p80
        %p391 = scmp.lt.s32.totalorder %s29, 1
        %s392 = scalar_select %p391, %s29, 1
        %s393 = scalar_lea.vmem %s2, %s392
        %p394 = pneg %p109
        %p395 = pneg %p106
        %p396 = scmp.lt.s32.totalorder %s29, 1
        %s397 = scalar_select %p396, %s29, 1
        %s398 = smul.addr %s397, 4
        %s399 = smul.addr %s398, 4
        %s400 = scalar_lea.vmem %s3, %s399
        %p401 = pneg %p135
        %p402 = pneg %p132
        %p403 = scmp.lt.s32.totalorder %s29, 1
        %s404 = scalar_select %p403, %s29, 1
        %s405 = smul.addr %s404, 4
        %s406 = smul.addr %s405, 4
        %s407 = scalar_lea.vmem %s4, %s406
        %p408 = pneg %p161
        %p409 = pneg %p158
        %p410 = scmp.lt.s32.totalorder %s29, 1
        %s411 = scalar_select %p410, %s29, 1
        %s412 = scalar_lea.vmem %s5, %s411
        %p413 = pneg %p187
        %p414 = pneg %p184
        %p415 = scmp.lt.s32.totalorder %s29, 1
        %s416 = scalar_select %p415, %s29, 1
        %s417 = smul.addr %s416, 8
        %s418 = smul.addr %s417, 4
        %s419 = scalar_lea.vmem %s6, %s418
        %p420 = pneg %p213
        %p421 = pneg %p210
        %s422 = sand.u32 %s226, 1
        %s423 = scalar_lea.sflag [#allocation7], %s422
        %s424 = sand.u32 %s226, 1
        %s425 = smul.addr %s424, 8
        %s426 = scalar_lea.vmem [#allocation6], %s425
        %p427 = pneg %p239
        %p428 = pneg %p236
        %p429 = pneg %p265
        %p430 = pneg %p262
        %s431 = smul.u32 2, %s28
        %p432 = scmp.lt.s32.totalorder %s29, 1
        %s433 = scalar_select %p432, %s29, 1
        %s434 = smul.addr %s433, 4
        %s435 = smul.addr %s434, 4
        %s436 = scalar_lea.vmem %s1, %s435
        %p437 = scmp.lt.s32.totalorder %s29, 1
        %s438 = scalar_select %p437, %s29, 1
        %s439 = scalar_lea.vmem %s2, %s438
        %p440 = scmp.lt.s32.totalorder %s29, 1
        %s441 = scalar_select %p440, %s29, 1
        %s442 = smul.addr %s441, 4
        %s443 = smul.addr %s442, 4
        %s444 = scalar_lea.vmem %s3, %s443
        %p445 = scmp.lt.s32.totalorder %s29, 1
        %s446 = scalar_select %p445, %s29, 1
        %s447 = smul.addr %s446, 4
        %s448 = smul.addr %s447, 4
        %s449 = scalar_lea.vmem %s4, %s448
        %p450 = scmp.lt.s32.totalorder %s29, 1
        %s451 = scalar_select %p450, %s29, 1
        %s452 = scalar_lea.vmem %s5, %s451
        %p453 = scmp.lt.s32.totalorder %s29, 1
        %s454 = scalar_select %p453, %s29, 1
        %s455 = smul.addr %s454, 8
        %s456 = smul.addr %s455, 4
        %s457 = scalar_lea.vmem %s6, %s456
        %s458 = smul.u32 2, %s28
        %p460 = scmp.eq.s32.totalorder %s29, 0
        // Predicated region
        $region61: #{tpu_custom_call.1} parent=51 // pred_check
          %p461 = pneg %p460
        $region62: #{tpu_custom_call.1} parent=51 // pred_check_branch
          %463 = sbr.rel (%p461) target = $region64
        $region63: #{tpu_custom_call.1} parent=51 // pred_region
          %v464 = vld [vmem:[#allocation3] sm:$0xff]
          %v465 = vld [vmem:[#allocation3 + $0x8] sm:$0xff]
          %vm466 = vcmask 261120
          %467 = vst.msk [vmem:[#allocation2] sm:$0xff] %vm466, %v464
          %468 = vst.msk [vmem:[#allocation2 + $0x8] sm:$0xff] %vm466, %v465
        $region64: #{tpu_custom_call.1} parent=51 // pred_fallthru
          _
        %v469 = vld [vmem:[#allocation2] sm:$0xff]
        %v470 = vld [vmem:[#allocation2 + $0x8] sm:$0xff]
        %v471 = vpack.c.bf16 %v470, %v469
        %v472 = vld [vmem:[%s377] sm:$0xff]
        %v473 = vld [vmem:[%s436] sm:$0xf]
        %v474 = vld [vmem:[%s436 + $0x4] sm:$0xf]
        %v475 = vld [vmem:[%s436 + $0x8] sm:$0xf]
        %v476 = vld [vmem:[%s436 + $0xc] sm:$0xf]
        %v477 = vld [vmem:[%s439] sm:$0x1]
        %v479 = vlaneseq
        %v480 = vshrl.u32 %v479, 7
        %v481 = vsub.s32 0, %v480
        %v482 = vrot.slane %v477, %v481
        %v488 = vunpack.c.l.b16 %v473
        %v489 = vunpack.c.l.b16 %v474
        %v490 = vunpack.c.l.b16 %v475
        %v491 = vunpack.c.l.b16 %v476
        %v492 = vpack.c.b16 %v489, %v488
        %v493 = vpack.c.b16 %v491, %v490
        %vm496 = vcmask 261120
        %v498 = vsel %vm496, %v471, 0
        %500 = vmatprep.subr.bf16.mxu0 0
        %501 = vmatpush1.bf16.msra.mxu0 0
        %502 = vmatprep.subr.bf16.mxu0 0
        %503 = vmatpush1.bf16.msra.mxu0 0
        %504 = vmatprep.subr.bf16.mxu0 0
        %505 = vmatpush1.bf16.msra.mxu0 0
        %506 = vmatprep.subr.bf16.mxu0 0
        %507 = vmatpush1.bf16.msra.mxu0 0
        %508 = vmatprep.subr.bf16.mxu0 0
        %509 = vmatpush1.bf16.msra.mxu0 0
        %510 = vmatprep.subr.bf16.mxu0 0
        %511 = vmatpush1.bf16.msra.mxu0 0
        %512 = vmatprep.subr.bf16.mxu0 0
        %513 = vmatpush1.bf16.msra.mxu0 %v493
        %514 = vmatprep.subr.bf16.mxu0 0
        %515 = vmatpush1.bf16.msra.mxu0 %v492
        %516 = vmatprep.subr.bf16.mxu0 0
        %517 = vmatpush2.bf16.msra.mxu0 0
        %518 = vmatprep.subr.bf16.mxu0 0
        %519 = vmatpush2.bf16.msra.mxu0 0
        %520 = vmatprep.subr.bf16.mxu0 0
        %521 = vmatpush2.bf16.msra.mxu0 0
        %522 = vmatprep.subr.bf16.mxu0 0
        %523 = vmatpush2.bf16.msra.mxu0 0
        %524 = vmatprep.subr.bf16.mxu0 0
        %525 = vmatpush2.bf16.msra.mxu0 0
        %526 = vmatprep.subr.bf16.mxu0 0
        %527 = vmatpush2.bf16.msra.mxu0 0
        %528 = vmatprep.subr.bf16.mxu0 0
        %529 = vmatpush2.bf16.msra.mxu0 0
        %530 = vmatprep.subr.bf16.mxu0 0
        %531 = vmatpush2.bf16.msra.mxu0 0
        %532 = vmatprep.mubr.bf16.mxu0 0
        %533 = vmatmul.mubr.bf16.gmra.mxu0 %v498
        %v534 = vpop.f32.mrf.mxu0
        %v535 = vadd.f32 %v482, %v534
        %v536 = vpop.f32.mrf.mxu0
        %v537 = vpop.f32.mrf.mxu0
        %v538 = vadd.f32 %v482, %v537
        %v539 = vpop.f32.mrf.mxu0
        %540 = vdwg.mxu0
        %v541 = vpack.c.bf16 %v538, %v535
        %v543 = vunpack.c.l.b16 %v541
        %v544 = vunpack.c.h.b16 %v541
        %v545 = vpack.c.b16 %v543, %v543
        %v546 = vpack.c.b16 %v544, %v544
        %547 = vrot.lane.b32.xlu0 %v545, 104
        %v548 = vpop.permute.xlu0 %547
        %549 = vrot.lane.b32.xlu0 %v546, 104
        %v550 = vpop.permute.xlu0 %549
        %551 = vrot.lane.b32.xlu0 %v545, 80
        %v552 = vpop.permute.xlu0 %551
        %553 = vrot.lane.b32.xlu0 %v546, 80
        %v554 = vpop.permute.xlu0 %553
        %555 = vrot.lane.b32.xlu0 %v545, 56
        %v556 = vpop.permute.xlu0 %555
        %557 = vrot.lane.b32.xlu0 %v546, 56
        %v558 = vpop.permute.xlu0 %557
        %559 = vrot.lane.b32.xlu0 %v545, 120
        %v560 = vpop.permute.xlu0 %559
        %vm561 = vcmask 64512
        %v563 = vsel %vm561, %v545, 0
        %v566 = vsel %vm561, %v560, 0
        %568 = vmatprep.subr.bf16.mxu0 0
        %569 = vmatpush1.bf16.xpose.msra.mxu0 0
        %570 = vmatprep.subr.bf16.mxu0 0
        %571 = vmatpush1.bf16.xpose.msra.mxu0 0
        %572 = vmatprep.subr.bf16.mxu0 0
        %573 = vmatpush1.bf16.xpose.msra.mxu0 0
        %574 = vmatprep.subr.bf16.mxu0 0
        %575 = vmatpush1.bf16.xpose.msra.mxu0 0
        %576 = vmatprep.subr.bf16.mxu0 0
        %577 = vmatpush1.bf16.xpose.msra.mxu0 0
        %578 = vmatprep.subr.bf16.mxu0 0
        %579 = vmatpush1.bf16.xpose.msra.mxu0 0
        %580 = vmatprep.subr.bf16.mxu0 0
        %581 = vmatpush1.bf16.xpose.msra.mxu0 0
        %582 = vmatprep.subr.bf16.mxu0 0
        %583 = vmatpush1.bf16.xpose.msra.mxu0 %v566
        %584 = vmatprep.subr.bf16.mxu0 0
        %585 = vmatpush2.bf16.xpose.msra.mxu0 0
        %586 = vmatprep.subr.bf16.mxu0 0
        %587 = vmatpush2.bf16.xpose.msra.mxu0 0
        %588 = vmatprep.subr.bf16.mxu0 0
        %589 = vmatpush2.bf16.xpose.msra.mxu0 0
        %590 = vmatprep.subr.bf16.mxu0 0
        %591 = vmatpush2.bf16.xpose.msra.mxu0 0
        %592 = vmatprep.subr.bf16.mxu0 0
        %593 = vmatpush2.bf16.xpose.msra.mxu0 0
        %594 = vmatprep.subr.bf16.mxu0 0
        %595 = vmatpush2.bf16.xpose.msra.mxu0 0
        %596 = vmatprep.subr.bf16.mxu0 0
        %597 = vmatpush2.bf16.xpose.msra.mxu0 0
        %598 = vmatprep.subr.bf16.mxu0 0
        %599 = vmatpush2.bf16.xpose.msra.mxu0 0
        %600 = vmatprep.mubr.bf16.mxu0 0
        %601 = vmatmul.mubr.bf16.gmra.mxu0 %v563
        %v602 = vpop.f32.mrf.mxu0
        %v603 = vadd.f32 0.0, %v602
        %v604 = vpop.f32.mrf.mxu0
        %v605 = vpop.f32.mrf.mxu0
        %v606 = vpop.f32.mrf.mxu0
        %607 = vdwg.mxu0
        %608 = vrot.lane.b32.xlu0 %v546, 120
        %v609 = vpop.permute.xlu0 %608
        %v611 = vsel %vm561, %v546, 0
        %v614 = vsel %vm561, %v609, 0
        %616 = vmatprep.subr.bf16.mxu0 0
        %617 = vmatpush1.bf16.xpose.msra.mxu0 0
        %618 = vmatprep.subr.bf16.mxu0 0
        %619 = vmatpush1.bf16.xpose.msra.mxu0 0
        %620 = vmatprep.subr.bf16.mxu0 0
        %621 = vmatpush1.bf16.xpose.msra.mxu0 0
        %622 = vmatprep.subr.bf16.mxu0 0
        %623 = vmatpush1.bf16.xpose.msra.mxu0 0
        %624 = vmatprep.subr.bf16.mxu0 0
        %625 = vmatpush1.bf16.xpose.msra.mxu0 0
        %626 = vmatprep.subr.bf16.mxu0 0
        %627 = vmatpush1.bf16.xpose.msra.mxu0 0
        %628 = vmatprep.subr.bf16.mxu0 0
        %629 = vmatpush1.bf16.xpose.msra.mxu0 0
        %630 = vmatprep.subr.bf16.mxu0 0
        %631 = vmatpush1.bf16.xpose.msra.mxu0 %v614
        %632 = vmatprep.subr.bf16.mxu0 0
        %633 = vmatpush2.bf16.xpose.msra.mxu0 0
        %634 = vmatprep.subr.bf16.mxu0 0
        %635 = vmatpush2.bf16.xpose.msra.mxu0 0
        %636 = vmatprep.subr.bf16.mxu0 0
        %637 = vmatpush2.bf16.xpose.msra.mxu0 0
        %638 = vmatprep.subr.bf16.mxu0 0
        %639 = vmatpush2.bf16.xpose.msra.mxu0 0
        %640 = vmatprep.subr.bf16.mxu0 0
        %641 = vmatpush2.bf16.xpose.msra.mxu0 0
        %642 = vmatprep.subr.bf16.mxu0 0
        %643 = vmatpush2.bf16.xpose.msra.mxu0 0
        %644 = vmatprep.subr.bf16.mxu0 0
        %645 = vmatpush2.bf16.xpose.msra.mxu0 0
        %646 = vmatprep.subr.bf16.mxu0 0
        %647 = vmatpush2.bf16.xpose.msra.mxu0 0
        %648 = vmatprep.mubr.bf16.mxu0 0
        %649 = vmatmul.mubr.bf16.gmra.mxu0 %v611
        %v650 = vpop.f32.mrf.mxu0
        %v651 = vadd.f32 0.0, %v650
        %v652 = vpop.f32.mrf.mxu0
        %v653 = vpop.f32.mrf.mxu0
        %v654 = vpop.f32.mrf.mxu0
        %655 = vdwg.mxu0
        %v656 = vunpack.c.l.b16 %v548
        %v657 = vpack.c.b16 %v656, %v656
        %658 = vrot.lane.b32.xlu0 %v657, 120
        %v659 = vpop.permute.xlu0 %658
        %v661 = vsel %vm561, %v548, 0
        %v664 = vsel %vm561, %v659, 0
        %666 = vmatprep.subr.bf16.mxu0 0
        %667 = vmatpush1.bf16.xpose.msra.mxu0 0
        %668 = vmatprep.subr.bf16.mxu0 0
        %669 = vmatpush1.bf16.xpose.msra.mxu0 0
        %670 = vmatprep.subr.bf16.mxu0 0
        %671 = vmatpush1.bf16.xpose.msra.mxu0 0
        %672 = vmatprep.subr.bf16.mxu0 0
        %673 = vmatpush1.bf16.xpose.msra.mxu0 0
        %674 = vmatprep.subr.bf16.mxu0 0
        %675 = vmatpush1.bf16.xpose.msra.mxu0 0
        %676 = vmatprep.subr.bf16.mxu0 0
        %677 = vmatpush1.bf16.xpose.msra.mxu0 0
        %678 = vmatprep.subr.bf16.mxu0 0
        %679 = vmatpush1.bf16.xpose.msra.mxu0 0
        %680 = vmatprep.subr.bf16.mxu0 0
        %681 = vmatpush1.bf16.xpose.msra.mxu0 %v664
        %682 = vmatprep.subr.bf16.mxu0 0
        %683 = vmatpush2.bf16.xpose.msra.mxu0 0
        %684 = vmatprep.subr.bf16.mxu0 0
        %685 = vmatpush2.bf16.xpose.msra.mxu0 0
        %686 = vmatprep.subr.bf16.mxu0 0
        %687 = vmatpush2.bf16.xpose.msra.mxu0 0
        %688 = vmatprep.subr.bf16.mxu0 0
        %689 = vmatpush2.bf16.xpose.msra.mxu0 0
        %690 = vmatprep.subr.bf16.mxu0 0
        %691 = vmatpush2.bf16.xpose.msra.mxu0 0
        %692 = vmatprep.subr.bf16.mxu0 0
        %693 = vmatpush2.bf16.xpose.msra.mxu0 0
        %694 = vmatprep.subr.bf16.mxu0 0
        %695 = vmatpush2.bf16.xpose.msra.mxu0 0
        %696 = vmatprep.subr.bf16.mxu0 0
        %697 = vmatpush2.bf16.xpose.msra.mxu0 0
        %698 = vmatprep.mubr.bf16.mxu0 0
        %699 = vmatmul.mubr.bf16.gmra.mxu0 %v661
        %v700 = vpop.f32.mrf.mxu0
        %v701 = vadd.f32 0.0, %v700
        %v702 = vpop.f32.mrf.mxu0
        %v703 = vpop.f32.mrf.mxu0
        %v704 = vpop.f32.mrf.mxu0
        %705 = vdwg.mxu0
        %v706 = vunpack.c.l.b16 %v550
        %v707 = vpack.c.b16 %v706, %v706
        %708 = vrot.lane.b32.xlu0 %v707, 120
        %v709 = vpop.permute.xlu0 %708
        %v711 = vsel %vm561, %v550, 0
        %v714 = vsel %vm561, %v709, 0
        %716 = vmatprep.subr.bf16.mxu0 0
        %717 = vmatpush1.bf16.xpose.msra.mxu0 0
        %718 = vmatprep.subr.bf16.mxu0 0
        %719 = vmatpush1.bf16.xpose.msra.mxu0 0
        %720 = vmatprep.subr.bf16.mxu0 0
        %721 = vmatpush1.bf16.xpose.msra.mxu0 0
        %722 = vmatprep.subr.bf16.mxu0 0
        %723 = vmatpush1.bf16.xpose.msra.mxu0 0
        %724 = vmatprep.subr.bf16.mxu0 0
        %725 = vmatpush1.bf16.xpose.msra.mxu0 0
        %726 = vmatprep.subr.bf16.mxu0 0
        %727 = vmatpush1.bf16.xpose.msra.mxu0 0
        %728 = vmatprep.subr.bf16.mxu0 0
        %729 = vmatpush1.bf16.xpose.msra.mxu0 0
        %730 = vmatprep.subr.bf16.mxu0 0
        %731 = vmatpush1.bf16.xpose.msra.mxu0 %v714
        %732 = vmatprep.subr.bf16.mxu0 0
        %733 = vmatpush2.bf16.xpose.msra.mxu0 0
        %734 = vmatprep.subr.bf16.mxu0 0
        %735 = vmatpush2.bf16.xpose.msra.mxu0 0
        %736 = vmatprep.subr.bf16.mxu0 0
        %737 = vmatpush2.bf16.xpose.msra.mxu0 0
        %738 = vmatprep.subr.bf16.mxu0 0
        %739 = vmatpush2.bf16.xpose.msra.mxu0 0
        %740 = vmatprep.subr.bf16.mxu0 0
        %741 = vmatpush2.bf16.xpose.msra.mxu0 0
        %742 = vmatprep.subr.bf16.mxu0 0
        %743 = vmatpush2.bf16.xpose.msra.mxu0 0
        %744 = vmatprep.subr.bf16.mxu0 0
        %745 = vmatpush2.bf16.xpose.msra.mxu0 0
        %746 = vmatprep.subr.bf16.mxu0 0
        %747 = vmatpush2.bf16.xpose.msra.mxu0 0
        %748 = vmatprep.mubr.bf16.mxu0 0
        %749 = vmatmul.mubr.bf16.gmra.mxu0 %v711
        %v750 = vpop.f32.mrf.mxu0
        %v751 = vadd.f32 0.0, %v750
        %v752 = vpop.f32.mrf.mxu0
        %v753 = vpop.f32.mrf.mxu0
        %v754 = vpop.f32.mrf.mxu0
        %755 = vdwg.mxu0
        %v756 = vunpack.c.l.b16 %v552
        %v757 = vpack.c.b16 %v756, %v756
        %758 = vrot.lane.b32.xlu0 %v757, 120
        %v759 = vpop.permute.xlu0 %758
        %v761 = vsel %vm561, %v552, 0
        %v764 = vsel %vm561, %v759, 0
        %766 = vmatprep.subr.bf16.mxu0 0
        %767 = vmatpush1.bf16.xpose.msra.mxu0 0
        %768 = vmatprep.subr.bf16.mxu0 0
        %769 = vmatpush1.bf16.xpose.msra.mxu0 0
        %770 = vmatprep.subr.bf16.mxu0 0
        %771 = vmatpush1.bf16.xpose.msra.mxu0 0
        %772 = vmatprep.subr.bf16.mxu0 0
        %773 = vmatpush1.bf16.xpose.msra.mxu0 0
        %774 = vmatprep.subr.bf16.mxu0 0
        %775 = vmatpush1.bf16.xpose.msra.mxu0 0
        %776 = vmatprep.subr.bf16.mxu0 0
        %777 = vmatpush1.bf16.xpose.msra.mxu0 0
        %778 = vmatprep.subr.bf16.mxu0 0
        %779 = vmatpush1.bf16.xpose.msra.mxu0 0
        %780 = vmatprep.subr.bf16.mxu0 0
        %781 = vmatpush1.bf16.xpose.msra.mxu0 %v764
        %782 = vmatprep.subr.bf16.mxu0 0
        %783 = vmatpush2.bf16.xpose.msra.mxu0 0
        %784 = vmatprep.subr.bf16.mxu0 0
        %785 = vmatpush2.bf16.xpose.msra.mxu0 0
        %786 = vmatprep.subr.bf16.mxu0 0
        %787 = vmatpush2.bf16.xpose.msra.mxu0 0
        %788 = vmatprep.subr.bf16.mxu0 0
        %789 = vmatpush2.bf16.xpose.msra.mxu0 0
        %790 = vmatprep.subr.bf16.mxu0 0
        %791 = vmatpush2.bf16.xpose.msra.mxu0 0
        %792 = vmatprep.subr.bf16.mxu0 0
        %793 = vmatpush2.bf16.xpose.msra.mxu0 0
        %794 = vmatprep.subr.bf16.mxu0 0
        %795 = vmatpush2.bf16.xpose.msra.mxu0 0
        %796 = vmatprep.subr.bf16.mxu0 0
        %797 = vmatpush2.bf16.xpose.msra.mxu0 0
        %798 = vmatprep.mubr.bf16.mxu0 0
        %799 = vmatmul.mubr.bf16.gmra.mxu0 %v761
        %v800 = vpop.f32.mrf.mxu0
        %v801 = vadd.f32 0.0, %v800
        %v802 = vpop.f32.mrf.mxu0
        %v803 = vpop.f32.mrf.mxu0
        %v804 = vpop.f32.mrf.mxu0
        %805 = vdwg.mxu0
        %v806 = vunpack.c.l.b16 %v554
        %v807 = vpack.c.b16 %v806, %v806
        %808 = vrot.lane.b32.xlu0 %v807, 120
        %v809 = vpop.permute.xlu0 %808
        %v811 = vsel %vm561, %v554, 0
        %v814 = vsel %vm561, %v809, 0
        %816 = vmatprep.subr.bf16.mxu0 0
        %817 = vmatpush1.bf16.xpose.msra.mxu0 0
        %818 = vmatprep.subr.bf16.mxu0 0
        %819 = vmatpush1.bf16.xpose.msra.mxu0 0
        %820 = vmatprep.subr.bf16.mxu0 0
        %821 = vmatpush1.bf16.xpose.msra.mxu0 0
        %822 = vmatprep.subr.bf16.mxu0 0
        %823 = vmatpush1.bf16.xpose.msra.mxu0 0
        %824 = vmatprep.subr.bf16.mxu0 0
        %825 = vmatpush1.bf16.xpose.msra.mxu0 0
        %826 = vmatprep.subr.bf16.mxu0 0
        %827 = vmatpush1.bf16.xpose.msra.mxu0 0
        %828 = vmatprep.subr.bf16.mxu0 0
        %829 = vmatpush1.bf16.xpose.msra.mxu0 0
        %830 = vmatprep.subr.bf16.mxu0 0
        %831 = vmatpush1.bf16.xpose.msra.mxu0 %v814
        %832 = vmatprep.subr.bf16.mxu0 0
        %833 = vmatpush2.bf16.xpose.msra.mxu0 0
        %834 = vmatprep.subr.bf16.mxu0 0
        %835 = vmatpush2.bf16.xpose.msra.mxu0 0
        %836 = vmatprep.subr.bf16.mxu0 0
        %837 = vmatpush2.bf16.xpose.msra.mxu0 0
        %838 = vmatprep.subr.bf16.mxu0 0
        %839 = vmatpush2.bf16.xpose.msra.mxu0 0
        %840 = vmatprep.subr.bf16.mxu0 0
        %841 = vmatpush2.bf16.xpose.msra.mxu0 0
        %842 = vmatprep.subr.bf16.mxu0 0
        %843 = vmatpush2.bf16.xpose.msra.mxu0 0
        %844 = vmatprep.subr.bf16.mxu0 0
        %845 = vmatpush2.bf16.xpose.msra.mxu0 0
        %846 = vmatprep.subr.bf16.mxu0 0
        %847 = vmatpush2.bf16.xpose.msra.mxu0 0
        %848 = vmatprep.mubr.bf16.mxu0 0
        %849 = vmatmul.mubr.bf16.gmra.mxu0 %v811
        %v850 = vpop.f32.mrf.mxu0
        %v851 = vadd.f32 0.0, %v850
        %v852 = vpop.f32.mrf.mxu0
        %v853 = vpop.f32.mrf.mxu0
        %v854 = vpop.f32.mrf.mxu0
        %855 = vdwg.mxu0
        %v856 = vunpack.c.l.b16 %v556
        %v857 = vpack.c.b16 %v856, %v856
        %858 = vrot.lane.b32.xlu0 %v857, 120
        %v859 = vpop.permute.xlu0 %858
        %v861 = vsel %vm561, %v556, 0
        %v864 = vsel %vm561, %v859, 0
        %866 = vmatprep.subr.bf16.mxu0 0
        %867 = vmatpush1.bf16.xpose.msra.mxu0 0
        %868 = vmatprep.subr.bf16.mxu0 0
        %869 = vmatpush1.bf16.xpose.msra.mxu0 0
        %870 = vmatprep.subr.bf16.mxu0 0
        %871 = vmatpush1.bf16.xpose.msra.mxu0 0
        %872 = vmatprep.subr.bf16.mxu0 0
        %873 = vmatpush1.bf16.xpose.msra.mxu0 0
        %874 = vmatprep.subr.bf16.mxu0 0
        %875 = vmatpush1.bf16.xpose.msra.mxu0 0
        %876 = vmatprep.subr.bf16.mxu0 0
        %877 = vmatpush1.bf16.xpose.msra.mxu0 0
        %878 = vmatprep.subr.bf16.mxu0 0
        %879 = vmatpush1.bf16.xpose.msra.mxu0 0
        %880 = vmatprep.subr.bf16.mxu0 0
        %881 = vmatpush1.bf16.xpose.msra.mxu0 %v864
        %882 = vmatprep.subr.bf16.mxu0 0
        %883 = vmatpush2.bf16.xpose.msra.mxu0 0
        %884 = vmatprep.subr.bf16.mxu0 0
        %885 = vmatpush2.bf16.xpose.msra.mxu0 0
        %886 = vmatprep.subr.bf16.mxu0 0
        %887 = vmatpush2.bf16.xpose.msra.mxu0 0
        %888 = vmatprep.subr.bf16.mxu0 0
        %889 = vmatpush2.bf16.xpose.msra.mxu0 0
        %890 = vmatprep.subr.bf16.mxu0 0
        %891 = vmatpush2.bf16.xpose.msra.mxu0 0
        %892 = vmatprep.subr.bf16.mxu0 0
        %893 = vmatpush2.bf16.xpose.msra.mxu0 0
        %894 = vmatprep.subr.bf16.mxu0 0
        %895 = vmatpush2.bf16.xpose.msra.mxu0 0
        %896 = vmatprep.subr.bf16.mxu0 0
        %897 = vmatpush2.bf16.xpose.msra.mxu0 0
        %898 = vmatprep.mubr.bf16.mxu0 0
        %899 = vmatmul.mubr.bf16.gmra.mxu0 %v861
        %v900 = vpop.f32.mrf.mxu0
        %v901 = vadd.f32 0.0, %v900
        %v902 = vpop.f32.mrf.mxu0
        %v903 = vpop.f32.mrf.mxu0
        %v904 = vpop.f32.mrf.mxu0
        %905 = vdwg.mxu0
        %v906 = vunpack.c.l.b16 %v558
        %v907 = vpack.c.b16 %v906, %v906
        %908 = vrot.lane.b32.xlu0 %v907, 120
        %v909 = vpop.permute.xlu0 %908
        %v911 = vsel %vm561, %v558, 0
        %v914 = vsel %vm561, %v909, 0
        %916 = vmatprep.subr.bf16.mxu0 0
        %917 = vmatpush1.bf16.xpose.msra.mxu0 0
        %918 = vmatprep.subr.bf16.mxu0 0
        %919 = vmatpush1.bf16.xpose.msra.mxu0 0
        %920 = vmatprep.subr.bf16.mxu0 0
        %921 = vmatpush1.bf16.xpose.msra.mxu0 0
        %922 = vmatprep.subr.bf16.mxu0 0
        %923 = vmatpush1.bf16.xpose.msra.mxu0 0
        %924 = vmatprep.subr.bf16.mxu0 0
        %925 = vmatpush1.bf16.xpose.msra.mxu0 0
        %926 = vmatprep.subr.bf16.mxu0 0
        %927 = vmatpush1.bf16.xpose.msra.mxu0 0
        %928 = vmatprep.subr.bf16.mxu0 0
        %929 = vmatpush1.bf16.xpose.msra.mxu0 0
        %930 = vmatprep.subr.bf16.mxu0 0
        %931 = vmatpush1.bf16.xpose.msra.mxu0 %v914
        %932 = vmatprep.subr.bf16.mxu0 0
        %933 = vmatpush2.bf16.xpose.msra.mxu0 0
        %934 = vmatprep.subr.bf16.mxu0 0
        %935 = vmatpush2.bf16.xpose.msra.mxu0 0
        %936 = vmatprep.subr.bf16.mxu0 0
        %937 = vmatpush2.bf16.xpose.msra.mxu0 0
        %938 = vmatprep.subr.bf16.mxu0 0
        %939 = vmatpush2.bf16.xpose.msra.mxu0 0
        %940 = vmatprep.subr.bf16.mxu0 0
        %941 = vmatpush2.bf16.xpose.msra.mxu0 0
        %942 = vmatprep.subr.bf16.mxu0 0
        %943 = vmatpush2.bf16.xpose.msra.mxu0 0
        %944 = vmatprep.subr.bf16.mxu0 0
        %945 = vmatpush2.bf16.xpose.msra.mxu0 0
        %946 = vmatprep.subr.bf16.mxu0 0
        %947 = vmatpush2.bf16.xpose.msra.mxu0 0
        %948 = vmatprep.mubr.bf16.mxu0 0
        %949 = vmatmul.mubr.bf16.gmra.mxu0 %v911
        %v950 = vpop.f32.mrf.mxu0
        %v951 = vadd.f32 0.0, %v950
        %v952 = vpop.f32.mrf.mxu0
        %v953 = vpop.f32.mrf.mxu0
        %v954 = vpop.f32.mrf.mxu0
        %955 = vdwg.mxu0
        %v956 = vmul.f32 %v603, 0.35355338
        %v957 = vmul.f32 %v651, 0.35355338
        %v958 = vmul.f32 %v701, 0.35355338
        %v959 = vmul.f32 %v751, 0.35355338
        %v960 = vmul.f32 %v801, 0.35355338
        %v961 = vmul.f32 %v851, 0.35355338
        %v962 = vmul.f32 %v901, 0.35355338
        %v963 = vmul.f32 %v951, 0.35355338
        %v964 = vsel %vm561, %v956, -inf
        %965 = vmax.xlane.f32.xlu0 %v964
        %v966 = vpop.xlane.xlu0 %965
        %v967 = vsel %vm561, %v957, -inf
        %968 = vmax.xlane.f32.xlu0 %v967
        %v969 = vpop.xlane.xlu0 %968
        %v970 = vsel %vm561, %v958, -inf
        %971 = vmax.xlane.f32.xlu0 %v970
        %v972 = vpop.xlane.xlu0 %971
        %v973 = vsel %vm561, %v959, -inf
        %974 = vmax.xlane.f32.xlu0 %v973
        %v975 = vpop.xlane.xlu0 %974
        %v976 = vsel %vm561, %v960, -inf
        %977 = vmax.xlane.f32.xlu0 %v976
        %v978 = vpop.xlane.xlu0 %977
        %v979 = vsel %vm561, %v961, -inf
        %980 = vmax.xlane.f32.xlu0 %v979
        %v981 = vpop.xlane.xlu0 %980
        %v982 = vsel %vm561, %v962, -inf
        %983 = vmax.xlane.f32.xlu0 %v982
        %v984 = vpop.xlane.xlu0 %983
        %v985 = vsel %vm561, %v963, -inf
        %986 = vmax.xlane.f32.xlu0 %v985
        %v987 = vpop.xlane.xlu0 %986
        %v988 = vsub.f32 %v956, %v966
        %v989 = vsub.f32 %v957, %v969
        %v990 = vsub.f32 %v958, %v972
        %v991 = vsub.f32 %v959, %v975
        %v992 = vsub.f32 %v960, %v978
        %v993 = vsub.f32 %v961, %v981
        %v994 = vsub.f32 %v962, %v984
        %v995 = vsub.f32 %v963, %v987
        %v996 = vmul.f32 %v988, 1.442695
        %v997 = vpow.pop %v996
        %v998 = vmul.f32 %v989, 1.442695
        %v999 = vpow.pop %v998
        %v1000 = vmul.f32 %v990, 1.442695
        %v1001 = vpow.pop %v1000
        %v1002 = vmul.f32 %v991, 1.442695
        %v1003 = vpow.pop %v1002
        %v1004 = vmul.f32 %v992, 1.442695
        %v1005 = vpow.pop %v1004
        %v1006 = vmul.f32 %v993, 1.442695
        %v1007 = vpow.pop %v1006
        %v1008 = vmul.f32 %v994, 1.442695
        %v1009 = vpow.pop %v1008
        %v1010 = vmul.f32 %v995, 1.442695
        %v1011 = vpow.pop %v1010
        %v1012 = vsel %vm561, %v997, 0.0
        %1013 = vadd.xlane.f32.xlu0 %v1012
        %v1014 = vpop.xlane.xlu0 %1013
        %v1015 = vsel %vm561, %v999, 0.0
        %1016 = vadd.xlane.f32.xlu0 %v1015
        %v1017 = vpop.xlane.xlu0 %1016
        %v1018 = vsel %vm561, %v1001, 0.0
        %1019 = vadd.xlane.f32.xlu0 %v1018
        %v1020 = vpop.xlane.xlu0 %1019
        %v1021 = vsel %vm561, %v1003, 0.0
        %1022 = vadd.xlane.f32.xlu0 %v1021
        %v1023 = vpop.xlane.xlu0 %1022
        %v1024 = vsel %vm561, %v1005, 0.0
        %1025 = vadd.xlane.f32.xlu0 %v1024
        %v1026 = vpop.xlane.xlu0 %1025
        %v1027 = vsel %vm561, %v1007, 0.0
        %1028 = vadd.xlane.f32.xlu0 %v1027
        %v1029 = vpop.xlane.xlu0 %1028
        %v1030 = vsel %vm561, %v1009, 0.0
        %1031 = vadd.xlane.f32.xlu0 %v1030
        %v1032 = vpop.xlane.xlu0 %1031
        %v1033 = vsel %vm561, %v1011, 0.0
        %1034 = vadd.xlane.f32.xlu0 %v1033
        %v1035 = vpop.xlane.xlu0 %1034
        %v1036 = vrcp.pop %v1014
        %v1037 = vrcp.pop %v1017
        %v1038 = vrcp.pop %v1020
        %v1039 = vrcp.pop %v1023
        %v1040 = vrcp.pop %v1026
        %v1041 = vrcp.pop %v1029
        %v1042 = vrcp.pop %v1032
        %v1043 = vrcp.pop %v1035
        %v1044 = vmul.f32 %v997, %v1036
        %v1045 = vmul.f32 %v999, %v1037
        %v1046 = vmul.f32 %v1001, %v1038
        %v1047 = vmul.f32 %v1003, %v1039
        %v1048 = vmul.f32 %v1005, %v1040
        %v1049 = vmul.f32 %v1007, %v1041
        %v1050 = vmul.f32 %v1009, %v1042
        %v1051 = vmul.f32 %v1011, %v1043
        %v1052 = vpack.c.bf16 %v1044, %v1044
        %v1053 = vpack.c.bf16 %v1045, %v1045
        %v1054 = vpack.c.bf16 %v1046, %v1046
        %v1055 = vpack.c.bf16 %v1047, %v1047
        %v1056 = vpack.c.bf16 %v1048, %v1048
        %v1057 = vpack.c.bf16 %v1049, %v1049
        %v1058 = vpack.c.bf16 %v1050, %v1050
        %v1059 = vpack.c.bf16 %v1051, %v1051
        %1060 = vrot.lane.b32.xlu0 %v545, 112
        %v1061 = vpop.permute.xlu0 %1060
        %v1063 = vsel %vm561, %v1052, 0
        %vm1065 = vcmask 1043456
        %v1067 = vsel %vm1065, %v1061, 0
        %1069 = vmatprep.subr.bf16.mxu0 0
        %1070 = vmatpush1.bf16.msra.mxu0 0
        %1071 = vmatprep.subr.bf16.mxu0 0
        %1072 = vmatpush1.bf16.msra.mxu0 0
        %1073 = vmatprep.subr.bf16.mxu0 0
        %1074 = vmatpush1.bf16.msra.mxu0 0
        %1075 = vmatprep.subr.bf16.mxu0 0
        %1076 = vmatpush1.bf16.msra.mxu0 0
        %1077 = vmatprep.subr.bf16.mxu0 0
        %1078 = vmatpush1.bf16.msra.mxu0 0
        %1079 = vmatprep.subr.bf16.mxu0 0
        %1080 = vmatpush1.bf16.msra.mxu0 0
        %1081 = vmatprep.subr.bf16.mxu0 0
        %1082 = vmatpush1.bf16.msra.mxu0 0
        %1083 = vmatprep.subr.bf16.mxu0 0
        %1084 = vmatpush1.bf16.msra.mxu0 %v1067
        %1085 = vmatprep.subr.bf16.mxu0 0
        %1086 = vmatpush2.bf16.msra.mxu0 0
        %1087 = vmatprep.subr.bf16.mxu0 0
        %1088 = vmatpush2.bf16.msra.mxu0 0
        %1089 = vmatprep.subr.bf16.mxu0 0
        %1090 = vmatpush2.bf16.msra.mxu0 0
        %1091 = vmatprep.subr.bf16.mxu0 0
        %1092 = vmatpush2.bf16.msra.mxu0 0
        %1093 = vmatprep.subr.bf16.mxu0 0
        %1094 = vmatpush2.bf16.msra.mxu0 0
        %1095 = vmatprep.subr.bf16.mxu0 0
        %1096 = vmatpush2.bf16.msra.mxu0 0
        %1097 = vmatprep.subr.bf16.mxu0 0
        %1098 = vmatpush2.bf16.msra.mxu0 0
        %1099 = vmatprep.subr.bf16.mxu0 0
        %1100 = vmatpush2.bf16.msra.mxu0 0
        %1101 = vmatprep.mubr.bf16.mxu0 0
        %1102 = vmatmul.mubr.bf16.gmra.mxu0 %v1063
        %v1103 = vpop.f32.mrf.mxu0
        %v1104 = vadd.f32 0.0, %v1103
        %v1105 = vpop.f32.mrf.mxu0
        %v1106 = vpop.f32.mrf.mxu0
        %v1107 = vpop.f32.mrf.mxu0
        %1108 = vdwg.mxu0
        %1109 = vrot.lane.b32.xlu0 %v546, 112
        %v1110 = vpop.permute.xlu0 %1109
        %v1112 = vsel %vm561, %v1053, 0
        %v1115 = vsel %vm1065, %v1110, 0
        %1117 = vmatprep.subr.bf16.mxu0 0
        %1118 = vmatpush1.bf16.msra.mxu0 0
        %1119 = vmatprep.subr.bf16.mxu0 0
        %1120 = vmatpush1.bf16.msra.mxu0 0
        %1121 = vmatprep.subr.bf16.mxu0 0
        %1122 = vmatpush1.bf16.msra.mxu0 0
        %1123 = vmatprep.subr.bf16.mxu0 0
        %1124 = vmatpush1.bf16.msra.mxu0 0
        %1125 = vmatprep.subr.bf16.mxu0 0
        %1126 = vmatpush1.bf16.msra.mxu0 0
        %1127 = vmatprep.subr.bf16.mxu0 0
        %1128 = vmatpush1.bf16.msra.mxu0 0
        %1129 = vmatprep.subr.bf16.mxu0 0
        %1130 = vmatpush1.bf16.msra.mxu0 0
        %1131 = vmatprep.subr.bf16.mxu0 0
        %1132 = vmatpush1.bf16.msra.mxu0 %v1115
        %1133 = vmatprep.subr.bf16.mxu0 0
        %1134 = vmatpush2.bf16.msra.mxu0 0
        %1135 = vmatprep.subr.bf16.mxu0 0
        %1136 = vmatpush2.bf16.msra.mxu0 0
        %1137 = vmatprep.subr.bf16.mxu0 0
        %1138 = vmatpush2.bf16.msra.mxu0 0
        %1139 = vmatprep.subr.bf16.mxu0 0
        %1140 = vmatpush2.bf16.msra.mxu0 0
        %1141 = vmatprep.subr.bf16.mxu0 0
        %1142 = vmatpush2.bf16.msra.mxu0 0
        %1143 = vmatprep.subr.bf16.mxu0 0
        %1144 = vmatpush2.bf16.msra.mxu0 0
        %1145 = vmatprep.subr.bf16.mxu0 0
        %1146 = vmatpush2.bf16.msra.mxu0 0
        %1147 = vmatprep.subr.bf16.mxu0 0
        %1148 = vmatpush2.bf16.msra.mxu0 0
        %1149 = vmatprep.mubr.bf16.mxu0 0
        %1150 = vmatmul.mubr.bf16.gmra.mxu0 %v1112
        %v1151 = vpop.f32.mrf.mxu0
        %v1152 = vadd.f32 0.0, %v1151
        %v1153 = vpop.f32.mrf.mxu0
        %v1154 = vpop.f32.mrf.mxu0
        %v1155 = vpop.f32.mrf.mxu0
        %1156 = vdwg.mxu0
        %1157 = vrot.lane.b32.xlu0 %v657, 112
        %v1158 = vpop.permute.xlu0 %1157
        %v1160 = vsel %vm561, %v1054, 0
        %v1163 = vsel %vm1065, %v1158, 0
        %1165 = vmatprep.subr.bf16.mxu0 0
        %1166 = vmatpush1.bf16.msra.mxu0 0
        %1167 = vmatprep.subr.bf16.mxu0 0
        %1168 = vmatpush1.bf16.msra.mxu0 0
        %1169 = vmatprep.subr.bf16.mxu0 0
        %1170 = vmatpush1.bf16.msra.mxu0 0
        %1171 = vmatprep.subr.bf16.mxu0 0
        %1172 = vmatpush1.bf16.msra.mxu0 0
        %1173 = vmatprep.subr.bf16.mxu0 0
        %1174 = vmatpush1.bf16.msra.mxu0 0
        %1175 = vmatprep.subr.bf16.mxu0 0
        %1176 = vmatpush1.bf16.msra.mxu0 0
        %1177 = vmatprep.subr.bf16.mxu0 0
        %1178 = vmatpush1.bf16.msra.mxu0 0
        %1179 = vmatprep.subr.bf16.mxu0 0
        %1180 = vmatpush1.bf16.msra.mxu0 %v1163
        %1181 = vmatprep.subr.bf16.mxu0 0
        %1182 = vmatpush2.bf16.msra.mxu0 0
        %1183 = vmatprep.subr.bf16.mxu0 0
        %1184 = vmatpush2.bf16.msra.mxu0 0
        %1185 = vmatprep.subr.bf16.mxu0 0
        %1186 = vmatpush2.bf16.msra.mxu0 0
        %1187 = vmatprep.subr.bf16.mxu0 0
        %1188 = vmatpush2.bf16.msra.mxu0 0
        %1189 = vmatprep.subr.bf16.mxu0 0
        %1190 = vmatpush2.bf16.msra.mxu0 0
        %1191 = vmatprep.subr.bf16.mxu0 0
        %1192 = vmatpush2.bf16.msra.mxu0 0
        %1193 = vmatprep.subr.bf16.mxu0 0
        %1194 = vmatpush2.bf16.msra.mxu0 0
        %1195 = vmatprep.subr.bf16.mxu0 0
        %1196 = vmatpush2.bf16.msra.mxu0 0
        %1197 = vmatprep.mubr.bf16.mxu0 0
        %1198 = vmatmul.mubr.bf16.gmra.mxu0 %v1160
        %v1199 = vpop.f32.mrf.mxu0
        %v1200 = vadd.f32 0.0, %v1199
        %v1201 = vpop.f32.mrf.mxu0
        %v1202 = vpop.f32.mrf.mxu0
        %v1203 = vpop.f32.mrf.mxu0
        %1204 = vdwg.mxu0
        %1205 = vrot.lane.b32.xlu0 %v707, 112
        %v1206 = vpop.permute.xlu0 %1205
        %v1208 = vsel %vm561, %v1055, 0
        %v1211 = vsel %vm1065, %v1206, 0
        %1213 = vmatprep.subr.bf16.mxu0 0
        %1214 = vmatpush1.bf16.msra.mxu0 0
        %1215 = vmatprep.subr.bf16.mxu0 0
        %1216 = vmatpush1.bf16.msra.mxu0 0
        %1217 = vmatprep.subr.bf16.mxu0 0
        %1218 = vmatpush1.bf16.msra.mxu0 0
        %1219 = vmatprep.subr.bf16.mxu0 0
        %1220 = vmatpush1.bf16.msra.mxu0 0
        %1221 = vmatprep.subr.bf16.mxu0 0
        %1222 = vmatpush1.bf16.msra.mxu0 0
        %1223 = vmatprep.subr.bf16.mxu0 0
        %1224 = vmatpush1.bf16.msra.mxu0 0
        %1225 = vmatprep.subr.bf16.mxu0 0
        %1226 = vmatpush1.bf16.msra.mxu0 0
        %1227 = vmatprep.subr.bf16.mxu0 0
        %1228 = vmatpush1.bf16.msra.mxu0 %v1211
        %1229 = vmatprep.subr.bf16.mxu0 0
        %1230 = vmatpush2.bf16.msra.mxu0 0
        %1231 = vmatprep.subr.bf16.mxu0 0
        %1232 = vmatpush2.bf16.msra.mxu0 0
        %1233 = vmatprep.subr.bf16.mxu0 0
        %1234 = vmatpush2.bf16.msra.mxu0 0
        %1235 = vmatprep.subr.bf16.mxu0 0
        %1236 = vmatpush2.bf16.msra.mxu0 0
        %1237 = vmatprep.subr.bf16.mxu0 0
        %1238 = vmatpush2.bf16.msra.mxu0 0
        %1239 = vmatprep.subr.bf16.mxu0 0
        %1240 = vmatpush2.bf16.msra.mxu0 0
        %1241 = vmatprep.subr.bf16.mxu0 0
        %1242 = vmatpush2.bf16.msra.mxu0 0
        %1243 = vmatprep.subr.bf16.mxu0 0
        %1244 = vmatpush2.bf16.msra.mxu0 0
        %1245 = vmatprep.mubr.bf16.mxu0 0
        %1246 = vmatmul.mubr.bf16.gmra.mxu0 %v1208
        %v1247 = vpop.f32.mrf.mxu0
        %v1248 = vadd.f32 0.0, %v1247
        %v1249 = vpop.f32.mrf.mxu0
        %v1250 = vpop.f32.mrf.mxu0
        %v1251 = vpop.f32.mrf.mxu0
        %1252 = vdwg.mxu0
        %1253 = vrot.lane.b32.xlu0 %v757, 112
        %v1254 = vpop.permute.xlu0 %1253
        %v1256 = vsel %vm561, %v1056, 0
        %v1259 = vsel %vm1065, %v1254, 0
        %1261 = vmatprep.subr.bf16.mxu0 0
        %1262 = vmatpush1.bf16.msra.mxu0 0
        %1263 = vmatprep.subr.bf16.mxu0 0
        %1264 = vmatpush1.bf16.msra.mxu0 0
        %1265 = vmatprep.subr.bf16.mxu0 0
        %1266 = vmatpush1.bf16.msra.mxu0 0
        %1267 = vmatprep.subr.bf16.mxu0 0
        %1268 = vmatpush1.bf16.msra.mxu0 0
        %1269 = vmatprep.subr.bf16.mxu0 0
        %1270 = vmatpush1.bf16.msra.mxu0 0
        %1271 = vmatprep.subr.bf16.mxu0 0
        %1272 = vmatpush1.bf16.msra.mxu0 0
        %1273 = vmatprep.subr.bf16.mxu0 0
        %1274 = vmatpush1.bf16.msra.mxu0 0
        %1275 = vmatprep.subr.bf16.mxu0 0
        %1276 = vmatpush1.bf16.msra.mxu0 %v1259
        %1277 = vmatprep.subr.bf16.mxu0 0
        %1278 = vmatpush2.bf16.msra.mxu0 0
        %1279 = vmatprep.subr.bf16.mxu0 0
        %1280 = vmatpush2.bf16.msra.mxu0 0
        %1281 = vmatprep.subr.bf16.mxu0 0
        %1282 = vmatpush2.bf16.msra.mxu0 0
        %1283 = vmatprep.subr.bf16.mxu0 0
        %1284 = vmatpush2.bf16.msra.mxu0 0
        %1285 = vmatprep.subr.bf16.mxu0 0
        %1286 = vmatpush2.bf16.msra.mxu0 0
        %1287 = vmatprep.subr.bf16.mxu0 0
        %1288 = vmatpush2.bf16.msra.mxu0 0
        %1289 = vmatprep.subr.bf16.mxu0 0
        %1290 = vmatpush2.bf16.msra.mxu0 0
        %1291 = vmatprep.subr.bf16.mxu0 0
        %1292 = vmatpush2.bf16.msra.mxu0 0
        %1293 = vmatprep.mubr.bf16.mxu0 0
        %1294 = vmatmul.mubr.bf16.gmra.mxu0 %v1256
        %v1295 = vpop.f32.mrf.mxu0
        %v1296 = vadd.f32 0.0, %v1295
        %v1297 = vpop.f32.mrf.mxu0
        %v1298 = vpop.f32.mrf.mxu0
        %v1299 = vpop.f32.mrf.mxu0
        %1300 = vdwg.mxu0
        %1301 = vrot.lane.b32.xlu0 %v807, 112
        %v1302 = vpop.permute.xlu0 %1301
        %v1304 = vsel %vm561, %v1057, 0
        %v1307 = vsel %vm1065, %v1302, 0
        %1309 = vmatprep.subr.bf16.mxu0 0
        %1310 = vmatpush1.bf16.msra.mxu0 0
        %1311 = vmatprep.subr.bf16.mxu0 0
        %1312 = vmatpush1.bf16.msra.mxu0 0
        %1313 = vmatprep.subr.bf16.mxu0 0
        %1314 = vmatpush1.bf16.msra.mxu0 0
        %1315 = vmatprep.subr.bf16.mxu0 0
        %1316 = vmatpush1.bf16.msra.mxu0 0
        %1317 = vmatprep.subr.bf16.mxu0 0
        %1318 = vmatpush1.bf16.msra.mxu0 0
        %1319 = vmatprep.subr.bf16.mxu0 0
        %1320 = vmatpush1.bf16.msra.mxu0 0
        %1321 = vmatprep.subr.bf16.mxu0 0
        %1322 = vmatpush1.bf16.msra.mxu0 0
        %1323 = vmatprep.subr.bf16.mxu0 0
        %1324 = vmatpush1.bf16.msra.mxu0 %v1307
        %1325 = vmatprep.subr.bf16.mxu0 0
        %1326 = vmatpush2.bf16.msra.mxu0 0
        %1327 = vmatprep.subr.bf16.mxu0 0
        %1328 = vmatpush2.bf16.msra.mxu0 0
        %1329 = vmatprep.subr.bf16.mxu0 0
        %1330 = vmatpush2.bf16.msra.mxu0 0
        %1331 = vmatprep.subr.bf16.mxu0 0
        %1332 = vmatpush2.bf16.msra.mxu0 0
        %1333 = vmatprep.subr.bf16.mxu0 0
        %1334 = vmatpush2.bf16.msra.mxu0 0
        %1335 = vmatprep.subr.bf16.mxu0 0
        %1336 = vmatpush2.bf16.msra.mxu0 0
        %1337 = vmatprep.subr.bf16.mxu0 0
        %1338 = vmatpush2.bf16.msra.mxu0 0
        %1339 = vmatprep.subr.bf16.mxu0 0
        %1340 = vmatpush2.bf16.msra.mxu0 0
        %1341 = vmatprep.mubr.bf16.mxu0 0
        %1342 = vmatmul.mubr.bf16.gmra.mxu0 %v1304
        %v1343 = vpop.f32.mrf.mxu0
        %v1344 = vadd.f32 0.0, %v1343
        %v1345 = vpop.f32.mrf.mxu0
        %v1346 = vpop.f32.mrf.mxu0
        %v1347 = vpop.f32.mrf.mxu0
        %1348 = vdwg.mxu0
        %1349 = vrot.lane.b32.xlu0 %v857, 112
        %v1350 = vpop.permute.xlu0 %1349
        %v1352 = vsel %vm561, %v1058, 0
        %v1355 = vsel %vm1065, %v1350, 0
        %1357 = vmatprep.subr.bf16.mxu0 0
        %1358 = vmatpush1.bf16.msra.mxu0 0
        %1359 = vmatprep.subr.bf16.mxu0 0
        %1360 = vmatpush1.bf16.msra.mxu0 0
        %1361 = vmatprep.subr.bf16.mxu0 0
        %1362 = vmatpush1.bf16.msra.mxu0 0
        %1363 = vmatprep.subr.bf16.mxu0 0
        %1364 = vmatpush1.bf16.msra.mxu0 0
        %1365 = vmatprep.subr.bf16.mxu0 0
        %1366 = vmatpush1.bf16.msra.mxu0 0
        %1367 = vmatprep.subr.bf16.mxu0 0
        %1368 = vmatpush1.bf16.msra.mxu0 0
        %1369 = vmatprep.subr.bf16.mxu0 0
        %1370 = vmatpush1.bf16.msra.mxu0 0
        %1371 = vmatprep.subr.bf16.mxu0 0
        %1372 = vmatpush1.bf16.msra.mxu0 %v1355
        %1373 = vmatprep.subr.bf16.mxu0 0
        %1374 = vmatpush2.bf16.msra.mxu0 0
        %1375 = vmatprep.subr.bf16.mxu0 0
        %1376 = vmatpush2.bf16.msra.mxu0 0
        %1377 = vmatprep.subr.bf16.mxu0 0
        %1378 = vmatpush2.bf16.msra.mxu0 0
        %1379 = vmatprep.subr.bf16.mxu0 0
        %1380 = vmatpush2.bf16.msra.mxu0 0
        %1381 = vmatprep.subr.bf16.mxu0 0
        %1382 = vmatpush2.bf16.msra.mxu0 0
        %1383 = vmatprep.subr.bf16.mxu0 0
        %1384 = vmatpush2.bf16.msra.mxu0 0
        %1385 = vmatprep.subr.bf16.mxu0 0
        %1386 = vmatpush2.bf16.msra.mxu0 0
        %1387 = vmatprep.subr.bf16.mxu0 0
        %1388 = vmatpush2.bf16.msra.mxu0 0
        %1389 = vmatprep.mubr.bf16.mxu0 0
        %1390 = vmatmul.mubr.bf16.gmra.mxu0 %v1352
        %v1391 = vpop.f32.mrf.mxu0
        %v1392 = vadd.f32 0.0, %v1391
        %v1393 = vpop.f32.mrf.mxu0
        %v1394 = vpop.f32.mrf.mxu0
        %v1395 = vpop.f32.mrf.mxu0
        %1396 = vdwg.mxu0
        %1397 = vrot.lane.b32.xlu0 %v907, 112
        %v1398 = vpop.permute.xlu0 %1397
        %v1400 = vsel %vm561, %v1059, 0
        %v1403 = vsel %vm1065, %v1398, 0
        %1405 = vmatprep.subr.bf16.mxu0 0
        %1406 = vmatpush1.bf16.msra.mxu0 0
        %1407 = vmatprep.subr.bf16.mxu0 0
        %1408 = vmatpush1.bf16.msra.mxu0 0
        %1409 = vmatprep.subr.bf16.mxu0 0
        %1410 = vmatpush1.bf16.msra.mxu0 0
        %1411 = vmatprep.subr.bf16.mxu0 0
        %1412 = vmatpush1.bf16.msra.mxu0 0
        %1413 = vmatprep.subr.bf16.mxu0 0
        %1414 = vmatpush1.bf16.msra.mxu0 0
        %1415 = vmatprep.subr.bf16.mxu0 0
        %1416 = vmatpush1.bf16.msra.mxu0 0
        %1417 = vmatprep.subr.bf16.mxu0 0
        %1418 = vmatpush1.bf16.msra.mxu0 0
        %1419 = vmatprep.subr.bf16.mxu0 0
        %1420 = vmatpush1.bf16.msra.mxu0 %v1403
        %1421 = vmatprep.subr.bf16.mxu0 0
        %1422 = vmatpush2.bf16.msra.mxu0 0
        %1423 = vmatprep.subr.bf16.mxu0 0
        %1424 = vmatpush2.bf16.msra.mxu0 0
        %1425 = vmatprep.subr.bf16.mxu0 0
        %1426 = vmatpush2.bf16.msra.mxu0 0
        %1427 = vmatprep.subr.bf16.mxu0 0
        %1428 = vmatpush2.bf16.msra.mxu0 0
        %1429 = vmatprep.subr.bf16.mxu0 0
        %1430 = vmatpush2.bf16.msra.mxu0 0
        %1431 = vmatprep.subr.bf16.mxu0 0
        %1432 = vmatpush2.bf16.msra.mxu0 0
        %1433 = vmatprep.subr.bf16.mxu0 0
        %1434 = vmatpush2.bf16.msra.mxu0 0
        %1435 = vmatprep.subr.bf16.mxu0 0
        %1436 = vmatpush2.bf16.msra.mxu0 0
        %1437 = vmatprep.mubr.bf16.mxu0 0
        %1438 = vmatmul.mubr.bf16.gmra.mxu0 %v1400
        %v1439 = vpop.f32.mrf.mxu0
        %v1440 = vadd.f32 0.0, %v1439
        %v1441 = vpop.f32.mrf.mxu0
        %v1442 = vpop.f32.mrf.mxu0
        %v1443 = vpop.f32.mrf.mxu0
        %1444 = vdwg.mxu0
        %1447 = vrot.lane.b32.xlu0 %v1200, 8
        %v1448 = vpop.permute.xlu0 %1447
        %1449 = vrot.lane.b32.xlu0 %v1248, 8
        %v1450 = vpop.permute.xlu0 %1449
        %1455 = vrot.lane.b32.xlu0 %v1296, 16
        %v1456 = vpop.permute.xlu0 %1455
        %1457 = vrot.lane.b32.xlu0 %v1344, 16
        %v1458 = vpop.permute.xlu0 %1457
        %1463 = vrot.lane.b32.xlu0 %v1392, 24
        %v1464 = vpop.permute.xlu0 %1463
        %1465 = vrot.lane.b32.xlu0 %v1440, 24
        %v1466 = vpop.permute.xlu0 %1465
        %v1469 = vsel %vm561, %v1104, %v1448
        %v1470 = vsel %vm561, %v1152, %v1450
        %vm1471 = vcmask 130048
        %v1472 = vsel %vm1471, %v1469, %v1456
        %v1473 = vsel %vm1471, %v1470, %v1458
        %vm1474 = vcmask 195584
        %v1475 = vsel %vm1474, %v1472, %v1464
        %v1476 = vsel %vm1474, %v1473, %v1466
        %v1477 = vpack.c.bf16 %v1476, %v1475
        %v1478 = vld [vmem:[%s444] sm:$0xf]
        %v1479 = vld [vmem:[%s444 + $0x4] sm:$0xf]
        %v1480 = vld [vmem:[%s444 + $0x8] sm:$0xf]
        %v1481 = vld [vmem:[%s444 + $0xc] sm:$0xf]
        %v1482 = vlaneseq
        %v1483 = vshrl.u32 %v1482, 7
        %v1484 = vsub.s32 0, %v1483
        %v1485 = vrot.slane %v472, %v1484
        %v1490 = vunpack.c.l.b16 %v1478
        %v1491 = vunpack.c.l.b16 %v1479
        %v1492 = vunpack.c.l.b16 %v1480
        %v1493 = vunpack.c.l.b16 %v1481
        %v1494 = vpack.c.b16 %v1491, %v1490
        %v1495 = vpack.c.b16 %v1493, %v1492
        %v1499 = vsel %vm496, %v1477, 0
        %1501 = vmatprep.subr.bf16.mxu0 0
        %1502 = vmatpush1.bf16.msra.mxu0 0
        %1503 = vmatprep.subr.bf16.mxu0 0
        %1504 = vmatpush1.bf16.msra.mxu0 0
        %1505 = vmatprep.subr.bf16.mxu0 0
        %1506 = vmatpush1.bf16.msra.mxu0 0
        %1507 = vmatprep.subr.bf16.mxu0 0
        %1508 = vmatpush1.bf16.msra.mxu0 0
        %1509 = vmatprep.subr.bf16.mxu0 0
        %1510 = vmatpush1.bf16.msra.mxu0 0
        %1511 = vmatprep.subr.bf16.mxu0 0
        %1512 = vmatpush1.bf16.msra.mxu0 0
        %1513 = vmatprep.subr.bf16.mxu0 0
        %1514 = vmatpush1.bf16.msra.mxu0 %v1495
        %1515 = vmatprep.subr.bf16.mxu0 0
        %1516 = vmatpush1.bf16.msra.mxu0 %v1494
        %1517 = vmatprep.subr.bf16.mxu0 0
        %1518 = vmatpush2.bf16.msra.mxu0 0
        %1519 = vmatprep.subr.bf16.mxu0 0
        %1520 = vmatpush2.bf16.msra.mxu0 0
        %1521 = vmatprep.subr.bf16.mxu0 0
        %1522 = vmatpush2.bf16.msra.mxu0 0
        %1523 = vmatprep.subr.bf16.mxu0 0
        %1524 = vmatpush2.bf16.msra.mxu0 0
        %1525 = vmatprep.subr.bf16.mxu0 0
        %1526 = vmatpush2.bf16.msra.mxu0 0
        %1527 = vmatprep.subr.bf16.mxu0 0
        %1528 = vmatpush2.bf16.msra.mxu0 0
        %1529 = vmatprep.subr.bf16.mxu0 0
        %1530 = vmatpush2.bf16.msra.mxu0 0
        %1531 = vmatprep.subr.bf16.mxu0 0
        %1532 = vmatpush2.bf16.msra.mxu0 0
        %1533 = vmatprep.mubr.bf16.mxu0 0
        %1534 = vmatmul.mubr.bf16.gmra.mxu0 %v1499
        %v1535 = vpop.f32.mrf.mxu0
        %v1536 = vadd.f32 %v1485, %v1535
        %v1537 = vpop.f32.mrf.mxu0
        %v1538 = vpop.f32.mrf.mxu0
        %v1539 = vadd.f32 %v1485, %v1538
        %v1540 = vpop.f32.mrf.mxu0
        %1541 = vdwg.mxu0
        %v1542 = vadd.f32 %v1536, %v469
        %v1543 = vadd.f32 %v1539, %v470
        %v1544 = vsel %vm496, %v1542, 0.0
        %1545 = vadd.xlane.f32.xlu0 %v1544
        %v1546 = vpop.xlane.xlu0 %1545
        %v1547 = vsel %vm496, %v1543, 0.0
        %1548 = vadd.xlane.f32.xlu0 %v1547
        %v1549 = vpop.xlane.xlu0 %1548
        %v1550 = vrcp.pop 32.0
        %v1551 = vmul.f32 %v1546, %v1550
        %v1552 = vmul.f32 %v1549, %v1550
        %v1553 = vsub.f32 %v1542, %v1551
        %v1554 = vsub.f32 %v1543, %v1552
        %v1555 = vmul.f32 %v1553, %v1553
        %v1556 = vmul.f32 %v1554, %v1554
        %v1557 = vsel %vm496, %v1555, 0.0
        %1558 = vadd.xlane.f32.xlu0 %v1557
        %v1559 = vpop.xlane.xlu0 %1558
        %v1560 = vsel %vm496, %v1556, 0.0
        %1561 = vadd.xlane.f32.xlu0 %v1560
        %v1562 = vpop.xlane.xlu0 %1561
        %v1563 = vmul.f32 %v1559, %v1550
        %v1564 = vmul.f32 %v1562, %v1550
        %v1565 = vadd.f32 %v1563, 1e-05
        %v1566 = vadd.f32 %v1564, 1e-05
        %v1567 = vrsqrt.pop %v1565
        %v1568 = vrsqrt.pop %v1566
        %v1569 = vmul.f32 %v1553, %v1567
        %v1570 = vmul.f32 %v1554, %v1568
        %v1571 = vlaneseq
        %v1572 = vshrl.u32 %v1571, 7
        %v1573 = vsub.s32 1, %v1572
        %v1574 = vrot.slane %v472, %v1573
        %v1575 = vmul.f32 %v1569, %v1574
        %v1576 = vmul.f32 %v1570, %v1574
        %v1577 = vlaneseq
        %v1578 = vshrl.u32 %v1577, 7
        %v1579 = vsub.s32 2, %v1578
        %v1580 = vrot.slane %v472, %v1579
        %v1581 = vadd.f32 %v1575, %v1580
        %v1582 = vadd.f32 %v1576, %v1580
        %v1583 = vpack.c.bf16 %v1582, %v1581
        %v1584 = vld [vmem:[%s449] sm:$0xf]
        %v1585 = vld [vmem:[%s449 + $0x4] sm:$0xf]
        %v1586 = vld [vmem:[%s449 + $0x8] sm:$0xf]
        %v1587 = vld [vmem:[%s449 + $0xc] sm:$0xf]
        %v1588 = vld [vmem:[%s452] sm:$0x1]
        %v1590 = vlaneseq
        %v1591 = vshrl.u32 %v1590, 7
        %v1592 = vsub.s32 0, %v1591
        %v1593 = vrot.slane %v1588, %v1592
        %v1599 = vunpack.c.l.b16 %v1584
        %v1600 = vunpack.c.l.b16 %v1585
        %v1601 = vunpack.c.l.b16 %v1586
        %v1602 = vunpack.c.l.b16 %v1587
        %v1603 = vpack.c.b16 %v1600, %v1599
        %v1604 = vpack.c.b16 %v1602, %v1601
        %v1608 = vsel %vm496, %v1583, 0
        %1610 = vmatprep.subr.bf16.mxu0 0
        %1611 = vmatpush1.bf16.msra.mxu0 0
        %1612 = vmatprep.subr.bf16.mxu0 0
        %1613 = vmatpush1.bf16.msra.mxu0 0
        %1614 = vmatprep.subr.bf16.mxu0 0
        %1615 = vmatpush1.bf16.msra.mxu0 0
        %1616 = vmatprep.subr.bf16.mxu0 0
        %1617 = vmatpush1.bf16.msra.mxu0 0
        %1618 = vmatprep.subr.bf16.mxu0 0
        %1619 = vmatpush1.bf16.msra.mxu0 0
        %1620 = vmatprep.subr.bf16.mxu0 0
        %1621 = vmatpush1.bf16.msra.mxu0 0
        %1622 = vmatprep.subr.bf16.mxu0 0
        %1623 = vmatpush1.bf16.msra.mxu0 %v1604
        %1624 = vmatprep.subr.bf16.mxu0 0
        %1625 = vmatpush1.bf16.msra.mxu0 %v1603
        %1626 = vmatprep.subr.bf16.mxu0 0
        %1627 = vmatpush2.bf16.msra.mxu0 0
        %1628 = vmatprep.subr.bf16.mxu0 0
        %1629 = vmatpush2.bf16.msra.mxu0 0
        %1630 = vmatprep.subr.bf16.mxu0 0
        %1631 = vmatpush2.bf16.msra.mxu0 0
        %1632 = vmatprep.subr.bf16.mxu0 0
        %1633 = vmatpush2.bf16.msra.mxu0 0
        %1634 = vmatprep.subr.bf16.mxu0 0
        %1635 = vmatpush2.bf16.msra.mxu0 0
        %1636 = vmatprep.subr.bf16.mxu0 0
        %1637 = vmatpush2.bf16.msra.mxu0 0
        %1638 = vmatprep.subr.bf16.mxu0 0
        %1639 = vmatpush2.bf16.msra.mxu0 0
        %1640 = vmatprep.subr.bf16.mxu0 0
        %1641 = vmatpush2.bf16.msra.mxu0 0
        %1642 = vmatprep.mubr.bf16.mxu0 0
        %1643 = vmatmul.mubr.bf16.gmra.mxu0 %v1608
        %v1644 = vpop.f32.mrf.mxu0
        %v1645 = vadd.f32 %v1593, %v1644
        %v1646 = vpop.f32.mrf.mxu0
        %v1647 = vpop.f32.mrf.mxu0
        %v1648 = vadd.f32 %v1593, %v1647
        %v1649 = vpop.f32.mrf.mxu0
        %1650 = vdwg.mxu0
        %v1651 = vmax.f32 %v1645, 0.0
        %v1652 = vmax.f32 %v1648, 0.0
        %v1653 = vpack.c.bf16 %v1652, %v1651
        %v1654 = vld [vmem:[%s457] sm:$0xf]
        %v1655 = vld [vmem:[%s457 + $0x4] sm:$0xf]
        %v1656 = vld [vmem:[%s457 + $0x8] sm:$0xf]
        %v1657 = vld [vmem:[%s457 + $0xc] sm:$0xf]
        %v1658 = vld [vmem:[%s457 + $0x10] sm:$0xf]
        %v1659 = vld [vmem:[%s457 + $0x14] sm:$0xf]
        %v1660 = vld [vmem:[%s457 + $0x18] sm:$0xf]
        %v1661 = vld [vmem:[%s457 + $0x1c] sm:$0xf]
        %v1662 = vlaneseq
        %v1663 = vshrl.u32 %v1662, 7
        %v1664 = vsub.s32 3, %v1663
        %v1665 = vrot.slane %v472, %v1664
        %v1674 = vunpack.c.l.b16 %v1654
        %v1675 = vunpack.c.l.b16 %v1655
        %v1676 = vunpack.c.l.b16 %v1656
        %v1677 = vunpack.c.l.b16 %v1657
        %v1678 = vunpack.c.l.b16 %v1658
        %v1679 = vunpack.c.l.b16 %v1659
        %v1680 = vunpack.c.l.b16 %v1660
        %v1681 = vunpack.c.l.b16 %v1661
        %v1682 = vpack.c.b16 %v1675, %v1674
        %v1683 = vpack.c.b16 %v1677, %v1676
        %v1684 = vpack.c.b16 %v1679, %v1678
        %v1685 = vpack.c.b16 %v1681, %v1680
        %vm1690 = vcmask 523264
        %v1692 = vsel %vm1690, %v1653, 0
        %1694 = vmatprep.subr.bf16.mxu0 0
        %1695 = vmatpush1.bf16.msra.mxu0 0
        %1696 = vmatprep.subr.bf16.mxu0 0
        %1697 = vmatpush1.bf16.msra.mxu0 0
        %1698 = vmatprep.subr.bf16.mxu0 0
        %1699 = vmatpush1.bf16.msra.mxu0 0
        %1700 = vmatprep.subr.bf16.mxu0 0
        %1701 = vmatpush1.bf16.msra.mxu0 0
        %1702 = vmatprep.subr.bf16.mxu0 0
        %1703 = vmatpush1.bf16.msra.mxu0 %v1685
        %1704 = vmatprep.subr.bf16.mxu0 0
        %1705 = vmatpush1.bf16.msra.mxu0 %v1684
        %1706 = vmatprep.subr.bf16.mxu0 0
        %1707 = vmatpush1.bf16.msra.mxu0 %v1683
        %1708 = vmatprep.subr.bf16.mxu0 0
        %1709 = vmatpush1.bf16.msra.mxu0 %v1682
        %1710 = vmatprep.subr.bf16.mxu0 0
        %1711 = vmatpush2.bf16.msra.mxu0 0
        %1712 = vmatprep.subr.bf16.mxu0 0
        %1713 = vmatpush2.bf16.msra.mxu0 0
        %1714 = vmatprep.subr.bf16.mxu0 0
        %1715 = vmatpush2.bf16.msra.mxu0 0
        %1716 = vmatprep.subr.bf16.mxu0 0
        %1717 = vmatpush2.bf16.msra.mxu0 0
        %1718 = vmatprep.subr.bf16.mxu0 0
        %1719 = vmatpush2.bf16.msra.mxu0 0
        %1720 = vmatprep.subr.bf16.mxu0 0
        %1721 = vmatpush2.bf16.msra.mxu0 0
        %1722 = vmatprep.subr.bf16.mxu0 0
        %1723 = vmatpush2.bf16.msra.mxu0 0
        %1724 = vmatprep.subr.bf16.mxu0 0
        %1725 = vmatpush2.bf16.msra.mxu0 0
        %1726 = vmatprep.mubr.bf16.mxu0 0
        %1727 = vmatmul.mubr.bf16.gmra.mxu0 %v1692
        %v1728 = vpop.f32.mrf.mxu0
        %v1729 = vadd.f32 %v1665, %v1728
        %v1730 = vpop.f32.mrf.mxu0
        %v1731 = vpop.f32.mrf.mxu0
        %v1732 = vadd.f32 %v1665, %v1731
        %v1733 = vpop.f32.mrf.mxu0
        %1734 = vdwg.mxu0
        %v1735 = vadd.f32 %v1729, %v1581
        %v1736 = vadd.f32 %v1732, %v1582
        %v1737 = vsel %vm496, %v1735, 0.0
        %1738 = vadd.xlane.f32.xlu0 %v1737
        %v1739 = vpop.xlane.xlu0 %1738
        %v1740 = vsel %vm496, %v1736, 0.0
        %1741 = vadd.xlane.f32.xlu0 %v1740
        %v1742 = vpop.xlane.xlu0 %1741
        %v1743 = vmul.f32 %v1739, %v1550
        %v1744 = vmul.f32 %v1742, %v1550
        %v1745 = vsub.f32 %v1735, %v1743
        %v1746 = vsub.f32 %v1736, %v1744
        %v1747 = vmul.f32 %v1745, %v1745
        %v1748 = vmul.f32 %v1746, %v1746
        %v1749 = vsel %vm496, %v1747, 0.0
        %1750 = vadd.xlane.f32.xlu0 %v1749
        %v1751 = vpop.xlane.xlu0 %1750
        %v1752 = vsel %vm496, %v1748, 0.0
        %1753 = vadd.xlane.f32.xlu0 %v1752
        %v1754 = vpop.xlane.xlu0 %1753
        %v1755 = vmul.f32 %v1751, %v1550
        %v1756 = vmul.f32 %v1754, %v1550
        %v1757 = vadd.f32 %v1755, 1e-05
        %v1758 = vadd.f32 %v1756, 1e-05
        %v1759 = vrsqrt.pop %v1757
        %v1760 = vrsqrt.pop %v1758
        %v1761 = vmul.f32 %v1745, %v1759
        %v1762 = vmul.f32 %v1746, %v1760
        %v1763 = vlaneseq
        %v1764 = vshrl.u32 %v1763, 7
        %v1765 = vsub.s32 4, %v1764
        %v1766 = vrot.slane %v472, %v1765
        %v1767 = vmul.f32 %v1761, %v1766
        %v1768 = vmul.f32 %v1762, %v1766
        %v1769 = vlaneseq
        %v1770 = vshrl.u32 %v1769, 7
        %v1771 = vsub.s32 5, %v1770
        %v1772 = vrot.slane %v472, %v1771
        %v1773 = vadd.f32 %v1767, %v1772
        %v1774 = vadd.f32 %v1768, %v1772
        %p1775 = scmp.lt.s32.totalorder %s29, 1
        // Predicated region
        $region65: #{tpu_custom_call.1} parent=51 // pred_check
          %p1776 = pneg %p1775
        $region66: #{tpu_custom_call.1} parent=51 // pred_check_branch
          %1778 = sbr.rel (%p1776) target = $region68
        $region67: #{tpu_custom_call.1} parent=51 // pred_region
          %1779 = vst.msk [vmem:[#allocation2] sm:$0xff] %vm496, %v1773
          %1780 = vst.msk [vmem:[#allocation2 + $0x8] sm:$0xff] %vm496, %v1774
        $region68: #{tpu_custom_call.1} parent=51 // pred_fallthru
          _
        %p1781 = scmp.eq.s32.totalorder %s29, 1
        // Predicated region
        $region69: #{tpu_custom_call.1} parent=51 // pred_check
          %p1782 = pneg %p1781
        $region70: #{tpu_custom_call.1} parent=51 // pred_check_branch
          %1784 = sbr.rel (%p1782) target = $region72
        $region71: #{tpu_custom_call.1} parent=51 // pred_region
          %1785 = vst.msk [vmem:[#allocation8] sm:$0xff] %vm496, %v1773
          %1786 = vst.msk [vmem:[#allocation8 + $0x8] sm:$0xff] %vm496, %v1774
        $region72: #{tpu_custom_call.1} parent=51 // pred_fallthru
          _
        // Predicated region
        $region73: #{tpu_custom_call.1} parent=51 // pred_check
          %p1787 = pneg %p262
        $region74: #{tpu_custom_call.1} parent=51 // pred_check_branch
          %1789 = sbr.rel (%p1787) target = $region76
        $region75: #{tpu_custom_call.1} parent=51 // pred_region
          %s1790 = smul.u32 2, %s28
          %s1792 = ssub.s32 256, 256
          %1793 = vsyncadd [#allocation5], %s1792
          %s1794 = smul.addr %s1790, 128
          %s1795 = scalar_lea.hbm %s8, %s1794
          %s1796 = sshll.u32 [#allocation8], 4
          %s1797 = int_to_ptr.vmem [resolvable:$true] %s1796
          %1802 = dma.vmem_to_hbm [thread:$0]  %s1797, 256, %s1795, [#allocation5], 128, 128, 8
        $region76: #{tpu_custom_call.1} parent=51 // pred_fallthru
          _
        // Predicated region
        $region77: #{tpu_custom_call.1} parent=51 // pred_check
          %p1803 = pneg %p262
        $region78: #{tpu_custom_call.1} parent=51 // pred_check_branch
          %1805 = sbr.rel (%p1803) target = $region80
        $region79: #{tpu_custom_call.1} parent=51 // pred_region
          %1806 = dma.done [#allocation5], 256
        $region80: #{tpu_custom_call.1} parent=51 // pred_fallthru
          _
      $region52: #{tpu_custom_call.1} parent=5 // pred_fallthru
        _
      %p1807 = scmp.le.s32.totalorder 2, %s19
      // Predicated region
      $region81: #{tpu_custom_call.1} parent=5 // pred_check
        %p1808 = pneg %p1807
      $region82: #{tpu_custom_call.1} parent=5 // pred_check_branch
        %1810 = sbr.rel (%p1808) target = $region84
      $region83: #{tpu_custom_call.1} parent=5 // pred_region
        %s1811 = ssub.s32 %s19, 2
      $region84: #{tpu_custom_call.1} parent=5 // pred_fallthru
        _
    $region6: #{tpu_custom_call.1} parent=1 // loop_footer
      %s23 = sadd.s32 1, %s19
    $region7: #{tpu_custom_call.1} parent=1 // loop_footer_branch
      %18 = sbr.rel target = $region3
    $region8: #{tpu_custom_call.1} parent=1 // loop_exit
      _
    %1812 = vsyncpa [#allocation4], 1
    %s1813 = scalar_lea.sflag [#allocation4], 1
    %1814 = vsyncpa %s1813, 1
    %1815 = vsyncpa [#allocation7], 1
    %s1816 = scalar_lea.sflag [#allocation7], 1
    %1817 = vsyncpa %s1816, 1
    %1818 = vsyncpa [#allocation5], 1
    %s1819 = scalar_lea.sflag [#allocation5], 1
    %1820 = vsyncpa %s1819, 1

</llo_original>
